<compile_context>
chip_gen: v5e
topology: v5e:2x2
jax: 0.10.0
libtpu: 0.0.40
codegen_flags: <defaults>
</compile_context>

<pallas_src>
import functools

import jax
import jax.numpy as jnp
from jax import lax
from jax.experimental import pallas as pl
from jax.experimental.pallas import tpu as pltpu


# --------------------------------------------------------------------------- #
# Fused kernel: bidirectional LSTM (bias=True) + Linear(2H -> P, no bias).
#   x_ref   : (T*N, I)   time-major flattened input, rows ordered (t, n)
#   wx_ref  : (I, 8H)    [W_ih_fwd^T | W_ih_bwd^T]
#   whf_ref : (H, 4H)    W_hh_fwd^T
#   whb_ref : (H, 4H)    W_hh_bwd^T
#   b_ref   : (1, 8H)    [b_ih_fwd + b_hh_fwd | b_ih_bwd + b_hh_bwd]
#   wpf_ref : (H, P)     projection rows multiplying the fwd hidden half
#   wpb_ref : (H, P)     projection rows multiplying the bwd hidden half
#   o_ref   : (T*N, P)   projected outputs, rows ordered (t, n)
# Gate column order inside every 4H block is PyTorch's (i, f, g, o).
# --------------------------------------------------------------------------- #
def birnn_project_kernel(n_batch, x_ref, wx_ref, whf_ref, whb_ref, b_ref,
                         wpf_ref, wpb_ref, o_ref,
                         gates_f, gates_b, hseq_f, hseq_b):
    TN = x_ref.shape[0]
    H = whf_ref.shape[0]
    H4 = 4 * H
    N = n_batch
    T = TN // N

    # ---- time-parallel input projection for BOTH directions: one MXU matmul.
    g_all = jnp.dot(x_ref[...], wx_ref[...],
                    preferred_element_type=jnp.float32) + b_ref[...]
    gates_f[...] = g_all[:, :H4]
    gates_b[...] = g_all[:, H4:]

    whf = whf_ref[...]
    whb = whb_ref[...]

    def lstm_cell(gate_pre, c_prev):
        i = jax.nn.sigmoid(gate_pre[:, 0 * H:1 * H])
        f = jax.nn.sigmoid(gate_pre[:, 1 * H:2 * H])
        g = jnp.tanh(gate_pre[:, 2 * H:3 * H])
        o = jax.nn.sigmoid(gate_pre[:, 3 * H:4 * H])
        c = f * c_prev + i * g
        h = o * jnp.tanh(c)
        return h, c

    def step(t, carry):
        h_f, c_f, h_b, c_b = carry
        rev = T - 1 - t
        # forward direction: original time index t
        gf = gates_f[pl.ds(t * N, N), :] + jnp.dot(
            h_f, whf, preferred_element_type=jnp.float32)
        h_f, c_f = lstm_cell(gf, c_f)
        hseq_f[pl.ds(t * N, N), :] = h_f
        # reverse direction: original time index T-1-t
        gb = gates_b[pl.ds(rev * N, N), :] + jnp.dot(
            h_b, whb, preferred_element_type=jnp.float32)
        h_b, c_b = lstm_cell(gb, c_b)
        hseq_b[pl.ds(rev * N, N), :] = h_b
        return h_f, c_f, h_b, c_b

    z = jnp.zeros((N, H), jnp.float32)
    # short, static trip count -> fully unroll (dynamic slice starts become
    # constants; LLO scheduler gets straight-line code)
    lax.fori_loop(0, T, step, (z, z, z, z), unroll=True)

    # ---- output projection, split per direction so the two hidden-sequence
    #      buffers never need a lane-axis concatenation.
    o_ref[...] = (jnp.dot(hseq_f[...], wpf_ref[...],
                          preferred_element_type=jnp.float32)
                  + jnp.dot(hseq_b[...], wpb_ref[...],
                            preferred_element_type=jnp.float32))


# ------------------------------- wrapper ----------------------------------- #
def _vmem_spec():
    return pl.BlockSpec(memory_space=pltpu.MemorySpace.VMEM)


@jax.jit
def rnnstack_forward(params, x):
    """RNNStack forward (default config). x: (N, W, Himg, C) -> (N, W, 1, hid)."""
    N, W, Himg, C = x.shape
    T, I = W, Himg * C
    H = params["w_hh_f"].shape[1]
    P = params["w_proj"].shape[0]

    # torch: x.view(N, W, Himg*C); go time-major so the recurrence reads
    # contiguous row blocks per step.
    x_tm = jnp.transpose(x.reshape(N, T, I), (1, 0, 2)).reshape(T * N, I)
    x_tm = x_tm.astype(jnp.float32)

    # Pre-transpose weights / pre-sum the two LSTM biases (tiny, one-off).
    wx = jnp.concatenate([params["w_ih_f"].T, params["w_ih_b"].T], axis=1)  # (I, 8H)
    b = jnp.concatenate([params["b_ih_f"] + params["b_hh_f"],
                         params["b_ih_b"] + params["b_hh_b"]])[None, :]     # (1, 8H)
    whf = params["w_hh_f"].T                                                # (H, 4H)
    whb = params["w_hh_b"].T
    wp_t = params["w_proj"].T                                               # (2H, P)
    wpf, wpb = wp_t[:H], wp_t[H:]

    out = pl.pallas_call(
        functools.partial(birnn_project_kernel, N),
        out_shape=jax.ShapeDtypeStruct((T * N, P), jnp.float32),
        in_specs=[_vmem_spec()] * 7,
        out_specs=_vmem_spec(),
        scratch_shapes=[
            pltpu.VMEM((T * N, 4 * H), jnp.float32),   # fwd gate pre-activations
            pltpu.VMEM((T * N, 4 * H), jnp.float32),   # bwd gate pre-activations
            pltpu.VMEM((T * N, H), jnp.float32),       # fwd hidden sequence
            pltpu.VMEM((T * N, H), jnp.float32),       # bwd hidden sequence
        ],
    )(x_tm, wx, whf, whb, b, wpf, wpb)

    # (T*N, P) -> (N, W, 1, P), matching torch's unsqueeze(2)
    return jnp.transpose(out.reshape(T, N, P), (1, 0, 2))[:, :, None, :]


# ------------------------------ parameters --------------------------------- #
def init_rnnstack_params(key, in_channels, image_height=1, hid_channels=64,
                         projection_channels=None):
    """Parameters of RNNStack's single default BatchRNN layer (PyTorch init/layout)."""
    input_size = in_channels * image_height
    proj = projection_channels or hid_channels
    k_lstm = 1.0 / float(hid_channels) ** 0.5
    k_proj = 1.0 / float(2 * hid_channels) ** 0.5
    keys = jax.random.split(key, 9)

    def u(kk, shape, scale):
        return jax.random.uniform(kk, shape, jnp.float32, -scale, scale)

    return {
        # forward-direction LSTM (PyTorch layout (4H, in)/(4H, H), gates i,f,g,o)
        "w_ih_f": u(keys[0], (4 * hid_channels, input_size), k_lstm),
        "w_hh_f": u(keys[1], (4 * hid_channels, hid_channels), k_lstm),
        "b_ih_f": u(keys[2], (4 * hid_channels,), k_lstm),
        "b_hh_f": u(keys[3], (4 * hid_channels,), k_lstm),
        # reverse-direction LSTM
        "w_ih_b": u(keys[4], (4 * hid_channels, input_size), k_lstm),
        "w_hh_b": u(keys[5], (4 * hid_channels, hid_channels), k_lstm),
        "b_ih_b": u(keys[6], (4 * hid_channels,), k_lstm),
        "b_hh_b": u(keys[7], (4 * hid_channels,), k_lstm),
        # projection: Linear(2*hid, proj, bias=False), weight (proj, 2*hid)
        "w_proj": u(keys[8], (proj, 2 * hid_channels), k_proj),
    }


# ------------------------------- reference --------------------------------- #
def rnnstack_reference(params, x):
    """Pure-JAX reference of the same forward, for correctness checking."""
    N, W, Himg, C = x.shape
    H = params["w_hh_f"].shape[1]
    xs = jnp.transpose(x.reshape(N, W, Himg * C), (1, 0, 2)).astype(jnp.float32)

    def run(xs_dir, w_ih, w_hh, b_ih, b_hh):
        def cell(carry, x_t):
            h, c = carry
            z = x_t @ w_ih.T + b_ih + h @ w_hh.T + b_hh
            i, f, g, o = jnp.split(z, 4, axis=-1)
            c = jax.nn.sigmoid(f) * c + jax.nn.sigmoid(i) * jnp.tanh(g)
            h = jax.nn.sigmoid(o) * jnp.tanh(c)
            return (h, c), h
        h0 = jnp.zeros((N, H), jnp.float32)
        _, hs = lax.scan(cell, (h0, h0), xs_dir)
        return hs                                            # (T, N, H)

    hf = run(xs, params["w_ih_f"], params["w_hh_f"],
             params["b_ih_f"], params["b_hh_f"])
    hb = run(xs[::-1], params["w_ih_b"], params["w_hh_b"],
             params["b_ih_b"], params["b_hh_b"])[::-1]
    out = jnp.concatenate([hf, hb], axis=-1) @ params["w_proj"].T   # (T, N, P)
    return jnp.transpose(out, (1, 0, 2))[:, :, None, :]


# --------------------------------- main ------------------------------------ #
if __name__ == "__main__":
    key = jax.random.PRNGKey(0)
    kp, kx = jax.random.split(key)

    # RNNStack defaults: hid_channels=64, bidirectional LSTM, bias=True,
    # projection_channels=None -> hid_channels, nb_layers=1, norm='none'.
    N, W, Himg, C = 2, 8, 4, 4          # batch, seq(width), image_height, in_channels
    hid = 64

    params = init_rnnstack_params(kp, in_channels=C, image_height=Himg,
                                  hid_channels=hid)
    x = jax.random.normal(kx, (N, W, Himg, C), jnp.float32)

    out = rnnstack_forward(params, x)
    out = jax.block_until_ready(out)
    assert out.shape == (N, W, 1, hid), out.shape

    ref = rnnstack_reference(params, x)
    max_err = float(jnp.max(jnp.abs(out - ref)))
    assert max_err < 1e-3, max_err

    print("KERNEL_OK")
</pallas_src>

<mosaic_0001>
module attributes {stable_mosaic.version = 11 : i64} {
  func.func @birnn_project_kernel(%arg0: memref<16x16xf32, #tpu.memory_space<vmem>>, %arg1: memref<16x512xf32, #tpu.memory_space<vmem>>, %arg2: memref<64x256xf32, #tpu.memory_space<vmem>>, %arg3: memref<64x256xf32, #tpu.memory_space<vmem>>, %arg4: memref<1x512xf32, #tpu.memory_space<vmem>>, %arg5: memref<64x64xf32, #tpu.memory_space<vmem>>, %arg6: memref<64x64xf32, #tpu.memory_space<vmem>>, %arg7: memref<16x64xf32, #tpu.memory_space<vmem>>, %arg8: memref<16x256xf32, #tpu.memory_space<vmem>>, %arg9: memref<16x256xf32, #tpu.memory_space<vmem>>, %arg10: memref<16x64xf32, #tpu.memory_space<vmem>>, %arg11: memref<16x64xf32, #tpu.memory_space<vmem>>) attributes {dimension_semantics = [], scalar_prefetch = 0 : i64, scratch_operands = 4 : i64, tpu.core_type = #tpu.core_type<tc>} {
    %c0 = arith.constant 0 : index
    %c0_0 = arith.constant 0 : index
    %0 = vector.load %arg0[%c0, %c0_0] : memref<16x16xf32, #tpu.memory_space<vmem>>, vector<16x16xf32>
    %c0_1 = arith.constant 0 : index
    %c0_2 = arith.constant 0 : index
    %1 = vector.load %arg1[%c0_1, %c0_2] : memref<16x512xf32, #tpu.memory_space<vmem>>, vector<16x512xf32>
    %cst = arith.constant dense<0.000000e+00> : vector<16x512xf32>
    %2 = tpu.matmul %0, %1, %cst {dimension_numbers = #tpu.dot_dimension_numbers<[1], [0], [0], [1], [0, 0, 1, 1], [], []>} : vector<16x16xf32>, vector<16x512xf32>, vector<16x512xf32> -> vector<16x512xf32>
    %c0_3 = arith.constant 0 : index
    %c0_4 = arith.constant 0 : index
    %3 = vector.load %arg4[%c0_3, %c0_4] : memref<1x512xf32, #tpu.memory_space<vmem>>, vector<1x512xf32>
    %4 = vector.broadcast %3 : vector<1x512xf32> to vector<16x512xf32>
    %5 = arith.addf %2, %4 : vector<16x512xf32>
    %6 = vector.extract_strided_slice %5 {offsets = [0, 0], sizes = [16, 256], strides = [1, 1]} : vector<16x512xf32> to vector<16x256xf32>
    %c0_5 = arith.constant 0 : index
    %c0_6 = arith.constant 0 : index
    %7 = vector.load %arg8[%c0_5, %c0_6] : memref<16x256xf32, #tpu.memory_space<vmem>>, vector<16x256xf32>
    tpu.vector_store %arg8[%c0_5, %c0_6], %6 {strides = array<i32>} : memref<16x256xf32, #tpu.memory_space<vmem>>, vector<16x256xf32>,
    %8 = vector.extract_strided_slice %5 {offsets = [0, 256], sizes = [16, 256], strides = [1, 1]} : vector<16x512xf32> to vector<16x256xf32>
    %c0_7 = arith.constant 0 : index
    %c0_8 = arith.constant 0 : index
    %9 = vector.load %arg9[%c0_7, %c0_8] : memref<16x256xf32, #tpu.memory_space<vmem>>, vector<16x256xf32>
    tpu.vector_store %arg9[%c0_7, %c0_8], %8 {strides = array<i32>} : memref<16x256xf32, #tpu.memory_space<vmem>>, vector<16x256xf32>,
    %c0_9 = arith.constant 0 : index
    %c0_10 = arith.constant 0 : index
    %10 = vector.load %arg2[%c0_9, %c0_10] : memref<64x256xf32, #tpu.memory_space<vmem>>, vector<64x256xf32>
    %c0_11 = arith.constant 0 : index
    %c0_12 = arith.constant 0 : index
    %11 = vector.load %arg3[%c0_11, %c0_12] : memref<64x256xf32, #tpu.memory_space<vmem>>, vector<64x256xf32>
    %cst_13 = arith.constant 0.000000e+00 : f32
    %12 = vector.broadcast %cst_13 : f32 to vector<2x64xf32>
    %c0_i32 = arith.constant 0 : i32
    %c7_i32 = arith.constant 7 : i32
    %13 = arith.subi %c7_i32, %c0_i32 : i32
    %c2_i32 = arith.constant 2 : i32
    %14 = arith.muli %c0_i32, %c2_i32 : i32
    %15 = arith.index_cast %14 : i32 to index
    %c0_14 = arith.constant 0 : index
    %16 = vector.load %arg8[%15, %c0_14] : memref<16x256xf32, #tpu.memory_space<vmem>>, vector<2x256xf32>
    %cst_15 = arith.constant dense<0.000000e+00> : vector<2x256xf32>
    %17 = tpu.matmul %12, %10, %cst_15 {dimension_numbers = #tpu.dot_dimension_numbers<[1], [0], [0], [1], [0, 0, 1, 1], [], []>} : vector<2x64xf32>, vector<64x256xf32>, vector<2x256xf32> -> vector<2x256xf32>
    %18 = arith.addf %16, %17 : vector<2x256xf32>
    %19 = vector.extract_strided_slice %18 {offsets = [0, 0], sizes = [2, 64], strides = [1, 1]} : vector<2x256xf32> to vector<2x64xf32>
    %20 = arith.negf %19 : vector<2x64xf32>
    %21 = math.exp %20 : vector<2x64xf32>
    %cst_16 = arith.constant 1.000000e+00 : f32
    %22 = vector.broadcast %cst_16 : f32 to vector<2x64xf32>
    %23 = arith.addf %22, %21 : vector<2x64xf32>
    %24 = arith.divf %22, %23 : vector<2x64xf32>
    %25 = vector.extract_strided_slice %18 {offsets = [0, 64], sizes = [2, 64], strides = [1, 1]} : vector<2x256xf32> to vector<2x64xf32>
    %26 = arith.negf %25 : vector<2x64xf32>
    %27 = math.exp %26 : vector<2x64xf32>
    %cst_17 = arith.constant 1.000000e+00 : f32
    %28 = vector.broadcast %cst_17 : f32 to vector<2x64xf32>
    %29 = arith.addf %28, %27 : vector<2x64xf32>
    %30 = arith.divf %28, %29 : vector<2x64xf32>
    %31 = vector.extract_strided_slice %18 {offsets = [0, 128], sizes = [2, 64], strides = [1, 1]} : vector<2x256xf32> to vector<2x64xf32>
    %32 = math.tanh %31 : vector<2x64xf32>
    %33 = vector.extract_strided_slice %18 {offsets = [0, 192], sizes = [2, 64], strides = [1, 1]} : vector<2x256xf32> to vector<2x64xf32>
    %34 = arith.negf %33 : vector<2x64xf32>
    %35 = math.exp %34 : vector<2x64xf32>
    %cst_18 = arith.constant 1.000000e+00 : f32
    %36 = vector.broadcast %cst_18 : f32 to vector<2x64xf32>
    %37 = arith.addf %36, %35 : vector<2x64xf32>
    %38 = arith.divf %36, %37 : vector<2x64xf32>
    %39 = arith.mulf %30, %12 : vector<2x64xf32>
    %40 = arith.mulf %24, %32 : vector<2x64xf32>
    %41 = arith.addf %39, %40 : vector<2x64xf32>
    %42 = math.tanh %41 : vector<2x64xf32>
    %43 = arith.mulf %38, %42 : vector<2x64xf32>
    %c2_i32_19 = arith.constant 2 : i32
    %44 = arith.muli %c0_i32, %c2_i32_19 : i32
    %45 = arith.index_cast %44 : i32 to index
    %c0_20 = arith.constant 0 : index
    %46 = vector.load %arg10[%45, %c0_20] : memref<16x64xf32, #tpu.memory_space<vmem>>, vector<2x64xf32>
    tpu.vector_store %arg10[%45, %c0_20], %43 {strides = array<i32>} : memref<16x64xf32, #tpu.memory_space<vmem>>, vector<2x64xf32>,
    %c2_i32_21 = arith.constant 2 : i32
    %47 = arith.muli %13, %c2_i32_21 : i32
    %48 = arith.index_cast %47 : i32 to index
    %c0_22 = arith.constant 0 : index
    %49 = vector.load %arg9[%48, %c0_22] : memref<16x256xf32, #tpu.memory_space<vmem>>, vector<2x256xf32>
    %cst_23 = arith.constant dense<0.000000e+00> : vector<2x256xf32>
    %50 = tpu.matmul %12, %11, %cst_23 {dimension_numbers = #tpu.dot_dimension_numbers<[1], [0], [0], [1], [0, 0, 1, 1], [], []>} : vector<2x64xf32>, vector<64x256xf32>, vector<2x256xf32> -> vector<2x256xf32>
    %51 = arith.addf %49, %50 : vector<2x256xf32>
    %52 = vector.extract_strided_slice %51 {offsets = [0, 0], sizes = [2, 64], strides = [1, 1]} : vector<2x256xf32> to vector<2x64xf32>
    %53 = arith.negf %52 : vector<2x64xf32>
    %54 = math.exp %53 : vector<2x64xf32>
    %cst_24 = arith.constant 1.000000e+00 : f32
    %55 = vector.broadcast %cst_24 : f32 to vector<2x64xf32>
    %56 = arith.addf %55, %54 : vector<2x64xf32>
    %57 = arith.divf %55, %56 : vector<2x64xf32>
    %58 = vector.extract_strided_slice %51 {offsets = [0, 64], sizes = [2, 64], strides = [1, 1]} : vector<2x256xf32> to vector<2x64xf32>
    %59 = arith.negf %58 : vector<2x64xf32>
    %60 = math.exp %59 : vector<2x64xf32>
    %cst_25 = arith.constant 1.000000e+00 : f32
    %61 = vector.broadcast %cst_25 : f32 to vector<2x64xf32>
    %62 = arith.addf %61, %60 : vector<2x64xf32>
    %63 = arith.divf %61, %62 : vector<2x64xf32>
    %64 = vector.extract_strided_slice %51 {offsets = [0, 128], sizes = [2, 64], strides = [1, 1]} : vector<2x256xf32> to vector<2x64xf32>
    %65 = math.tanh %64 : vector<2x64xf32>
    %66 = vector.extract_strided_slice %51 {offsets = [0, 192], sizes = [2, 64], strides = [1, 1]} : vector<2x256xf32> to vector<2x64xf32>
    %67 = arith.negf %66 : vector<2x64xf32>
    %68 = math.exp %67 : vector<2x64xf32>
    %cst_26 = arith.constant 1.000000e+00 : f32
    %69 = vector.broadcast %cst_26 : f32 to vector<2x64xf32>
    %70 = arith.addf %69, %68 : vector<2x64xf32>
    %71 = arith.divf %69, %70 : vector<2x64xf32>
    %72 = arith.mulf %63, %12 : vector<2x64xf32>
    %73 = arith.mulf %57, %65 : vector<2x64xf32>
    %74 = arith.addf %72, %73 : vector<2x64xf32>
    %75 = math.tanh %74 : vector<2x64xf32>
    %76 = arith.mulf %71, %75 : vector<2x64xf32>
    %c2_i32_27 = arith.constant 2 : i32
    %77 = arith.muli %13, %c2_i32_27 : i32
    %78 = arith.index_cast %77 : i32 to index
    %c0_28 = arith.constant 0 : index
    %79 = vector.load %arg11[%78, %c0_28] : memref<16x64xf32, #tpu.memory_space<vmem>>, vector<2x64xf32>
    tpu.vector_store %arg11[%78, %c0_28], %76 {strides = array<i32>} : memref<16x64xf32, #tpu.memory_space<vmem>>, vector<2x64xf32>,
    %c1_i32 = arith.constant 1 : i32
    %c7_i32_29 = arith.constant 7 : i32
    %80 = arith.subi %c7_i32_29, %c1_i32 : i32
    %c2_i32_30 = arith.constant 2 : i32
    %81 = arith.muli %c1_i32, %c2_i32_30 : i32
    %82 = arith.index_cast %81 : i32 to index
    %c0_31 = arith.constant 0 : index
    %83 = vector.load %arg8[%82, %c0_31] : memref<16x256xf32, #tpu.memory_space<vmem>>, vector<2x256xf32>
    %cst_32 = arith.constant dense<0.000000e+00> : vector<2x256xf32>
    %84 = tpu.matmul %43, %10, %cst_32 {dimension_numbers = #tpu.dot_dimension_numbers<[1], [0], [0], [1], [0, 0, 1, 1], [], []>} : vector<2x64xf32>, vector<64x256xf32>, vector<2x256xf32> -> vector<2x256xf32>
    %85 = arith.addf %83, %84 : vector<2x256xf32>
    %86 = vector.extract_strided_slice %85 {offsets = [0, 0], sizes = [2, 64], strides = [1, 1]} : vector<2x256xf32> to vector<2x64xf32>
    %87 = arith.negf %86 : vector<2x64xf32>
    %88 = math.exp %87 : vector<2x64xf32>
    %cst_33 = arith.constant 1.000000e+00 : f32
    %89 = vector.broadcast %cst_33 : f32 to vector<2x64xf32>
    %90 = arith.addf %89, %88 : vector<2x64xf32>
    %91 = arith.divf %89, %90 : vector<2x64xf32>
    %92 = vector.extract_strided_slice %85 {offsets = [0, 64], sizes = [2, 64], strides = [1, 1]} : vector<2x256xf32> to vector<2x64xf32>
    %93 = arith.negf %92 : vector<2x64xf32>
    %94 = math.exp %93 : vector<2x64xf32>
    %cst_34 = arith.constant 1.000000e+00 : f32
    %95 = vector.broadcast %cst_34 : f32 to vector<2x64xf32>
    %96 = arith.addf %95, %94 : vector<2x64xf32>
    %97 = arith.divf %95, %96 : vector<2x64xf32>
    %98 = vector.extract_strided_slice %85 {offsets = [0, 128], sizes = [2, 64], strides = [1, 1]} : vector<2x256xf32> to vector<2x64xf32>
    %99 = math.tanh %98 : vector<2x64xf32>
    %100 = vector.extract_strided_slice %85 {offsets = [0, 192], sizes = [2, 64], strides = [1, 1]} : vector<2x256xf32> to vector<2x64xf32>
    %101 = arith.negf %100 : vector<2x64xf32>
    %102 = math.exp %101 : vector<2x64xf32>
    %cst_35 = arith.constant 1.000000e+00 : f32
    %103 = vector.broadcast %cst_35 : f32 to vector<2x64xf32>
    %104 = arith.addf %103, %102 : vector<2x64xf32>
    %105 = arith.divf %103, %104 : vector<2x64xf32>
    %106 = arith.mulf %97, %41 : vector<2x64xf32>
    %107 = arith.mulf %91, %99 : vector<2x64xf32>
    %108 = arith.addf %106, %107 : vector<2x64xf32>
    %109 = math.tanh %108 : vector<2x64xf32>
    %110 = arith.mulf %105, %109 : vector<2x64xf32>
    %c2_i32_36 = arith.constant 2 : i32
    %111 = arith.muli %c1_i32, %c2_i32_36 : i32
    %112 = arith.index_cast %111 : i32 to index
    %c0_37 = arith.constant 0 : index
    %113 = vector.load %arg10[%112, %c0_37] : memref<16x64xf32, #tpu.memory_space<vmem>>, vector<2x64xf32>
    tpu.vector_store %arg10[%112, %c0_37], %110 {strides = array<i32>} : memref<16x64xf32, #tpu.memory_space<vmem>>, vector<2x64xf32>,
    %c2_i32_38 = arith.constant 2 : i32
    %114 = arith.muli %80, %c2_i32_38 : i32
    %115 = arith.index_cast %114 : i32 to index
    %c0_39 = arith.constant 0 : index
    %116 = vector.load %arg9[%115, %c0_39] : memref<16x256xf32, #tpu.memory_space<vmem>>, vector<2x256xf32>
    %cst_40 = arith.constant dense<0.000000e+00> : vector<2x256xf32>
    %117 = tpu.matmul %76, %11, %cst_40 {dimension_numbers = #tpu.dot_dimension_numbers<[1], [0], [0], [1], [0, 0, 1, 1], [], []>} : vector<2x64xf32>, vector<64x256xf32>, vector<2x256xf32> -> vector<2x256xf32>
    %118 = arith.addf %116, %117 : vector<2x256xf32>
    %119 = vector.extract_strided_slice %118 {offsets = [0, 0], sizes = [2, 64], strides = [1, 1]} : vector<2x256xf32> to vector<2x64xf32>
    %120 = arith.negf %119 : vector<2x64xf32>
    %121 = math.exp %120 : vector<2x64xf32>
    %cst_41 = arith.constant 1.000000e+00 : f32
    %122 = vector.broadcast %cst_41 : f32 to vector<2x64xf32>
    %123 = arith.addf %122, %121 : vector<2x64xf32>
    %124 = arith.divf %122, %123 : vector<2x64xf32>
    %125 = vector.extract_strided_slice %118 {offsets = [0, 64], sizes = [2, 64], strides = [1, 1]} : vector<2x256xf32> to vector<2x64xf32>
    %126 = arith.negf %125 : vector<2x64xf32>
    %127 = math.exp %126 : vector<2x64xf32>
    %cst_42 = arith.constant 1.000000e+00 : f32
    %128 = vector.broadcast %cst_42 : f32 to vector<2x64xf32>
    %129 = arith.addf %128, %127 : vector<2x64xf32>
    %130 = arith.divf %128, %129 : vector<2x64xf32>
    %131 = vector.extract_strided_slice %118 {offsets = [0, 128], sizes = [2, 64], strides = [1, 1]} : vector<2x256xf32> to vector<2x64xf32>
    %132 = math.tanh %131 : vector<2x64xf32>
    %133 = vector.extract_strided_slice %118 {offsets = [0, 192], sizes = [2, 64], strides = [1, 1]} : vector<2x256xf32> to vector<2x64xf32>
    %134 = arith.negf %133 : vector<2x64xf32>
    %135 = math.exp %134 : vector<2x64xf32>
    %cst_43 = arith.constant 1.000000e+00 : f32
    %136 = vector.broadcast %cst_43 : f32 to vector<2x64xf32>
    %137 = arith.addf %136, %135 : vector<2x64xf32>
    %138 = arith.divf %136, %137 : vector<2x64xf32>
    %139 = arith.mulf %130, %74 : vector<2x64xf32>
    %140 = arith.mulf %124, %132 : vector<2x64xf32>
    %141 = arith.addf %139, %140 : vector<2x64xf32>
    %142 = math.tanh %141 : vector<2x64xf32>
    %143 = arith.mulf %138, %142 : vector<2x64xf32>
    %c2_i32_44 = arith.constant 2 : i32
    %144 = arith.muli %80, %c2_i32_44 : i32
    %145 = arith.index_cast %144 : i32 to index
    %c0_45 = arith.constant 0 : index
    %146 = vector.load %arg11[%145, %c0_45] : memref<16x64xf32, #tpu.memory_space<vmem>>, vector<2x64xf32>
    tpu.vector_store %arg11[%145, %c0_45], %143 {strides = array<i32>} : memref<16x64xf32, #tpu.memory_space<vmem>>, vector<2x64xf32>,
    %c2_i32_46 = arith.constant 2 : i32
    %c7_i32_47 = arith.constant 7 : i32
    %147 = arith.subi %c7_i32_47, %c2_i32_46 : i32
    %c2_i32_48 = arith.constant 2 : i32
    %148 = arith.muli %c2_i32_46, %c2_i32_48 : i32
    %149 = arith.index_cast %148 : i32 to index
    %c0_49 = arith.constant 0 : index
    %150 = vector.load %arg8[%149, %c0_49] : memref<16x256xf32, #tpu.memory_space<vmem>>, vector<2x256xf32>
    %cst_50 = arith.constant dense<0.000000e+00> : vector<2x256xf32>
    %151 = tpu.matmul %110, %10, %cst_50 {dimension_numbers = #tpu.dot_dimension_numbers<[1], [0], [0], [1], [0, 0, 1, 1], [], []>} : vector<2x64xf32>, vector<64x256xf32>, vector<2x256xf32> -> vector<2x256xf32>
    %152 = arith.addf %150, %151 : vector<2x256xf32>
    %153 = vector.extract_strided_slice %152 {offsets = [0, 0], sizes = [2, 64], strides = [1, 1]} : vector<2x256xf32> to vector<2x64xf32>
    %154 = arith.negf %153 : vector<2x64xf32>
    %155 = math.exp %154 : vector<2x64xf32>
    %cst_51 = arith.constant 1.000000e+00 : f32
    %156 = vector.broadcast %cst_51 : f32 to vector<2x64xf32>
    %157 = arith.addf %156, %155 : vector<2x64xf32>
    %158 = arith.divf %156, %157 : vector<2x64xf32>
    %159 = vector.extract_strided_slice %152 {offsets = [0, 64], sizes = [2, 64], strides = [1, 1]} : vector<2x256xf32> to vector<2x64xf32>
    %160 = arith.negf %159 : vector<2x64xf32>
    %161 = math.exp %160 : vector<2x64xf32>
    %cst_52 = arith.constant 1.000000e+00 : f32
    %162 = vector.broadcast %cst_52 : f32 to vector<2x64xf32>
    %163 = arith.addf %162, %161 : vector<2x64xf32>
    %164 = arith.divf %162, %163 : vector<2x64xf32>
    %165 = vector.extract_strided_slice %152 {offsets = [0, 128], sizes = [2, 64], strides = [1, 1]} : vector<2x256xf32> to vector<2x64xf32>
    %166 = math.tanh %165 : vector<2x64xf32>
    %167 = vector.extract_strided_slice %152 {offsets = [0, 192], sizes = [2, 64], strides = [1, 1]} : vector<2x256xf32> to vector<2x64xf32>
    %168 = arith.negf %167 : vector<2x64xf32>
    %169 = math.exp %168 : vector<2x64xf32>
    %cst_53 = arith.constant 1.000000e+00 : f32
    %170 = vector.broadcast %cst_53 : f32 to vector<2x64xf32>
    %171 = arith.addf %170, %169 : vector<2x64xf32>
    %172 = arith.divf %170, %171 : vector<2x64xf32>
    %173 = arith.mulf %164, %108 : vector<2x64xf32>
    %174 = arith.mulf %158, %166 : vector<2x64xf32>
    %175 = arith.addf %173, %174 : vector<2x64xf32>
    %176 = math.tanh %175 : vector<2x64xf32>
    %177 = arith.mulf %172, %176 : vector<2x64xf32>
    %c2_i32_54 = arith.constant 2 : i32
    %178 = arith.muli %c2_i32_46, %c2_i32_54 : i32
    %179 = arith.index_cast %178 : i32 to index
    %c0_55 = arith.constant 0 : index
    %180 = vector.load %arg10[%179, %c0_55] : memref<16x64xf32, #tpu.memory_space<vmem>>, vector<2x64xf32>
    tpu.vector_store %arg10[%179, %c0_55], %177 {strides = array<i32>} : memref<16x64xf32, #tpu.memory_space<vmem>>, vector<2x64xf32>,
    %c2_i32_56 = arith.constant 2 : i32
    %181 = arith.muli %147, %c2_i32_56 : i32
    %182 = arith.index_cast %181 : i32 to index
    %c0_57 = arith.constant 0 : index
    %183 = vector.load %arg9[%182, %c0_57] : memref<16x256xf32, #tpu.memory_space<vmem>>, vector<2x256xf32>
    %cst_58 = arith.constant dense<0.000000e+00> : vector<2x256xf32>
    %184 = tpu.matmul %143, %11, %cst_58 {dimension_numbers = #tpu.dot_dimension_numbers<[1], [0], [0], [1], [0, 0, 1, 1], [], []>} : vector<2x64xf32>, vector<64x256xf32>, vector<2x256xf32> -> vector<2x256xf32>
    %185 = arith.addf %183, %184 : vector<2x256xf32>
    %186 = vector.extract_strided_slice %185 {offsets = [0, 0], sizes = [2, 64], strides = [1, 1]} : vector<2x256xf32> to vector<2x64xf32>
    %187 = arith.negf %186 : vector<2x64xf32>
    %188 = math.exp %187 : vector<2x64xf32>
    %cst_59 = arith.constant 1.000000e+00 : f32
    %189 = vector.broadcast %cst_59 : f32 to vector<2x64xf32>
    %190 = arith.addf %189, %188 : vector<2x64xf32>
    %191 = arith.divf %189, %190 : vector<2x64xf32>
    %192 = vector.extract_strided_slice %185 {offsets = [0, 64], sizes = [2, 64], strides = [1, 1]} : vector<2x256xf32> to vector<2x64xf32>
    %193 = arith.negf %192 : vector<2x64xf32>
    %194 = math.exp %193 : vector<2x64xf32>
    %cst_60 = arith.constant 1.000000e+00 : f32
    %195 = vector.broadcast %cst_60 : f32 to vector<2x64xf32>
    %196 = arith.addf %195, %194 : vector<2x64xf32>
    %197 = arith.divf %195, %196 : vector<2x64xf32>
    %198 = vector.extract_strided_slice %185 {offsets = [0, 128], sizes = [2, 64], strides = [1, 1]} : vector<2x256xf32> to vector<2x64xf32>
    %199 = math.tanh %198 : vector<2x64xf32>
    %200 = vector.extract_strided_slice %185 {offsets = [0, 192], sizes = [2, 64], strides = [1, 1]} : vector<2x256xf32> to vector<2x64xf32>
    %201 = arith.negf %200 : vector<2x64xf32>
    %202 = math.exp %201 : vector<2x64xf32>
    %cst_61 = arith.constant 1.000000e+00 : f32
    %203 = vector.broadcast %cst_61 : f32 to vector<2x64xf32>
    %204 = arith.addf %203, %202 : vector<2x64xf32>
    %205 = arith.divf %203, %204 : vector<2x64xf32>
    %206 = arith.mulf %197, %141 : vector<2x64xf32>
    %207 = arith.mulf %191, %199 : vector<2x64xf32>
    %208 = arith.addf %206, %207 : vector<2x64xf32>
    %209 = math.tanh %208 : vector<2x64xf32>
    %210 = arith.mulf %205, %209 : vector<2x64xf32>
    %c2_i32_62 = arith.constant 2 : i32
    %211 = arith.muli %147, %c2_i32_62 : i32
    %212 = arith.index_cast %211 : i32 to index
    %c0_63 = arith.constant 0 : index
    %213 = vector.load %arg11[%212, %c0_63] : memref<16x64xf32, #tpu.memory_space<vmem>>, vector<2x64xf32>
    tpu.vector_store %arg11[%212, %c0_63], %210 {strides = array<i32>} : memref<16x64xf32, #tpu.memory_space<vmem>>, vector<2x64xf32>,
    %c3_i32 = arith.constant 3 : i32
    %c7_i32_64 = arith.constant 7 : i32
    %214 = arith.subi %c7_i32_64, %c3_i32 : i32
    %c2_i32_65 = arith.constant 2 : i32
    %215 = arith.muli %c3_i32, %c2_i32_65 : i32
    %216 = arith.index_cast %215 : i32 to index
    %c0_66 = arith.constant 0 : index
    %217 = vector.load %arg8[%216, %c0_66] : memref<16x256xf32, #tpu.memory_space<vmem>>, vector<2x256xf32>
    %cst_67 = arith.constant dense<0.000000e+00> : vector<2x256xf32>
    %218 = tpu.matmul %177, %10, %cst_67 {dimension_numbers = #tpu.dot_dimension_numbers<[1], [0], [0], [1], [0, 0, 1, 1], [], []>} : vector<2x64xf32>, vector<64x256xf32>, vector<2x256xf32> -> vector<2x256xf32>
    %219 = arith.addf %217, %218 : vector<2x256xf32>
    %220 = vector.extract_strided_slice %219 {offsets = [0, 0], sizes = [2, 64], strides = [1, 1]} : vector<2x256xf32> to vector<2x64xf32>
    %221 = arith.negf %220 : vector<2x64xf32>
    %222 = math.exp %221 : vector<2x64xf32>
    %cst_68 = arith.constant 1.000000e+00 : f32
    %223 = vector.broadcast %cst_68 : f32 to vector<2x64xf32>
    %224 = arith.addf %223, %222 : vector<2x64xf32>
    %225 = arith.divf %223, %224 : vector<2x64xf32>
    %226 = vector.extract_strided_slice %219 {offsets = [0, 64], sizes = [2, 64], strides = [1, 1]} : vector<2x256xf32> to vector<2x64xf32>
    %227 = arith.negf %226 : vector<2x64xf32>
    %228 = math.exp %227 : vector<2x64xf32>
    %cst_69 = arith.constant 1.000000e+00 : f32
    %229 = vector.broadcast %cst_69 : f32 to vector<2x64xf32>
    %230 = arith.addf %229, %228 : vector<2x64xf32>
    %231 = arith.divf %229, %230 : vector<2x64xf32>
    %232 = vector.extract_strided_slice %219 {offsets = [0, 128], sizes = [2, 64], strides = [1, 1]} : vector<2x256xf32> to vector<2x64xf32>
    %233 = math.tanh %232 : vector<2x64xf32>
    %234 = vector.extract_strided_slice %219 {offsets = [0, 192], sizes = [2, 64], strides = [1, 1]} : vector<2x256xf32> to vector<2x64xf32>
    %235 = arith.negf %234 : vector<2x64xf32>
    %236 = math.exp %235 : vector<2x64xf32>
    %cst_70 = arith.constant 1.000000e+00 : f32
    %237 = vector.broadcast %cst_70 : f32 to vector<2x64xf32>
    %238 = arith.addf %237, %236 : vector<2x64xf32>
    %239 = arith.divf %237, %238 : vector<2x64xf32>
    %240 = arith.mulf %231, %175 : vector<2x64xf32>
    %241 = arith.mulf %225, %233 : vector<2x64xf32>
    %242 = arith.addf %240, %241 : vector<2x64xf32>
    %243 = math.tanh %242 : vector<2x64xf32>
    %244 = arith.mulf %239, %243 : vector<2x64xf32>
    %c2_i32_71 = arith.constant 2 : i32
    %245 = arith.muli %c3_i32, %c2_i32_71 : i32
    %246 = arith.index_cast %245 : i32 to index
    %c0_72 = arith.constant 0 : index
    %247 = vector.load %arg10[%246, %c0_72] : memref<16x64xf32, #tpu.memory_space<vmem>>, vector<2x64xf32>
    tpu.vector_store %arg10[%246, %c0_72], %244 {strides = array<i32>} : memref<16x64xf32, #tpu.memory_space<vmem>>, vector<2x64xf32>,
    %c2_i32_73 = arith.constant 2 : i32
    %248 = arith.muli %214, %c2_i32_73 : i32
    %249 = arith.index_cast %248 : i32 to index
    %c0_74 = arith.constant 0 : index
    %250 = vector.load %arg9[%249, %c0_74] : memref<16x256xf32, #tpu.memory_space<vmem>>, vector<2x256xf32>
    %cst_75 = arith.constant dense<0.000000e+00> : vector<2x256xf32>
    %251 = tpu.matmul %210, %11, %cst_75 {dimension_numbers = #tpu.dot_dimension_numbers<[1], [0], [0], [1], [0, 0, 1, 1], [], []>} : vector<2x64xf32>, vector<64x256xf32>, vector<2x256xf32> -> vector<2x256xf32>
    %252 = arith.addf %250, %251 : vector<2x256xf32>
    %253 = vector.extract_strided_slice %252 {offsets = [0, 0], sizes = [2, 64], strides = [1, 1]} : vector<2x256xf32> to vector<2x64xf32>
    %254 = arith.negf %253 : vector<2x64xf32>
    %255 = math.exp %254 : vector<2x64xf32>
    %cst_76 = arith.constant 1.000000e+00 : f32
    %256 = vector.broadcast %cst_76 : f32 to vector<2x64xf32>
    %257 = arith.addf %256, %255 : vector<2x64xf32>
    %258 = arith.divf %256, %257 : vector<2x64xf32>
    %259 = vector.extract_strided_slice %252 {offsets = [0, 64], sizes = [2, 64], strides = [1, 1]} : vector<2x256xf32> to vector<2x64xf32>
    %260 = arith.negf %259 : vector<2x64xf32>
    %261 = math.exp %260 : vector<2x64xf32>
    %cst_77 = arith.constant 1.000000e+00 : f32
    %262 = vector.broadcast %cst_77 : f32 to vector<2x64xf32>
    %263 = arith.addf %262, %261 : vector<2x64xf32>
    %264 = arith.divf %262, %263 : vector<2x64xf32>
    %265 = vector.extract_strided_slice %252 {offsets = [0, 128], sizes = [2, 64], strides = [1, 1]} : vector<2x256xf32> to vector<2x64xf32>
    %266 = math.tanh %265 : vector<2x64xf32>
    %267 = vector.extract_strided_slice %252 {offsets = [0, 192], sizes = [2, 64], strides = [1, 1]} : vector<2x256xf32> to vector<2x64xf32>
    %268 = arith.negf %267 : vector<2x64xf32>
    %269 = math.exp %268 : vector<2x64xf32>
    %cst_78 = arith.constant 1.000000e+00 : f32
    %270 = vector.broadcast %cst_78 : f32 to vector<2x64xf32>
    %271 = arith.addf %270, %269 : vector<2x64xf32>
    %272 = arith.divf %270, %271 : vector<2x64xf32>
    %273 = arith.mulf %264, %208 : vector<2x64xf32>
    %274 = arith.mulf %258, %266 : vector<2x64xf32>
    %275 = arith.addf %273, %274 : vector<2x64xf32>
    %276 = math.tanh %275 : vector<2x64xf32>
    %277 = arith.mulf %272, %276 : vector<2x64xf32>
    %c2_i32_79 = arith.constant 2 : i32
    %278 = arith.muli %214, %c2_i32_79 : i32
    %279 = arith.index_cast %278 : i32 to index
    %c0_80 = arith.constant 0 : index
    %280 = vector.load %arg11[%279, %c0_80] : memref<16x64xf32, #tpu.memory_space<vmem>>, vector<2x64xf32>
    tpu.vector_store %arg11[%279, %c0_80], %277 {strides = array<i32>} : memref<16x64xf32, #tpu.memory_space<vmem>>, vector<2x64xf32>,
    %c4_i32 = arith.constant 4 : i32
    %c7_i32_81 = arith.constant 7 : i32
    %281 = arith.subi %c7_i32_81, %c4_i32 : i32
    %c2_i32_82 = arith.constant 2 : i32
    %282 = arith.muli %c4_i32, %c2_i32_82 : i32
    %283 = arith.index_cast %282 : i32 to index
    %c0_83 = arith.constant 0 : index
    %284 = vector.load %arg8[%283, %c0_83] : memref<16x256xf32, #tpu.memory_space<vmem>>, vector<2x256xf32>
    %cst_84 = arith.constant dense<0.000000e+00> : vector<2x256xf32>
    %285 = tpu.matmul %244, %10, %cst_84 {dimension_numbers = #tpu.dot_dimension_numbers<[1], [0], [0], [1], [0, 0, 1, 1], [], []>} : vector<2x64xf32>, vector<64x256xf32>, vector<2x256xf32> -> vector<2x256xf32>
    %286 = arith.addf %284, %285 : vector<2x256xf32>
    %287 = vector.extract_strided_slice %286 {offsets = [0, 0], sizes = [2, 64], strides = [1, 1]} : vector<2x256xf32> to vector<2x64xf32>
    %288 = arith.negf %287 : vector<2x64xf32>
    %289 = math.exp %288 : vector<2x64xf32>
    %cst_85 = arith.constant 1.000000e+00 : f32
    %290 = vector.broadcast %cst_85 : f32 to vector<2x64xf32>
    %291 = arith.addf %290, %289 : vector<2x64xf32>
    %292 = arith.divf %290, %291 : vector<2x64xf32>
    %293 = vector.extract_strided_slice %286 {offsets = [0, 64], sizes = [2, 64], strides = [1, 1]} : vector<2x256xf32> to vector<2x64xf32>
    %294 = arith.negf %293 : vector<2x64xf32>
    %295 = math.exp %294 : vector<2x64xf32>
    %cst_86 = arith.constant 1.000000e+00 : f32
    %296 = vector.broadcast %cst_86 : f32 to vector<2x64xf32>
    %297 = arith.addf %296, %295 : vector<2x64xf32>
    %298 = arith.divf %296, %297 : vector<2x64xf32>
    %299 = vector.extract_strided_slice %286 {offsets = [0, 128], sizes = [2, 64], strides = [1, 1]} : vector<2x256xf32> to vector<2x64xf32>
    %300 = math.tanh %299 : vector<2x64xf32>
    %301 = vector.extract_strided_slice %286 {offsets = [0, 192], sizes = [2, 64], strides = [1, 1]} : vector<2x256xf32> to vector<2x64xf32>
    %302 = arith.negf %301 : vector<2x64xf32>
    %303 = math.exp %302 : vector<2x64xf32>
    %cst_87 = arith.constant 1.000000e+00 : f32
    %304 = vector.broadcast %cst_87 : f32 to vector<2x64xf32>
    %305 = arith.addf %304, %303 : vector<2x64xf32>
    %306 = arith.divf %304, %305 : vector<2x64xf32>
    %307 = arith.mulf %298, %242 : vector<2x64xf32>
    %308 = arith.mulf %292, %300 : vector<2x64xf32>
    %309 = arith.addf %307, %308 : vector<2x64xf32>
    %310 = math.tanh %309 : vector<2x64xf32>
    %311 = arith.mulf %306, %310 : vector<2x64xf32>
    %c2_i32_88 = arith.constant 2 : i32
    %312 = arith.muli %c4_i32, %c2_i32_88 : i32
    %313 = arith.index_cast %312 : i32 to index
    %c0_89 = arith.constant 0 : index
    %314 = vector.load %arg10[%313, %c0_89] : memref<16x64xf32, #tpu.memory_space<vmem>>, vector<2x64xf32>
    tpu.vector_store %arg10[%313, %c0_89], %311 {strides = array<i32>} : memref<16x64xf32, #tpu.memory_space<vmem>>, vector<2x64xf32>,
    %c2_i32_90 = arith.constant 2 : i32
    %315 = arith.muli %281, %c2_i32_90 : i32
    %316 = arith.index_cast %315 : i32 to index
    %c0_91 = arith.constant 0 : index
    %317 = vector.load %arg9[%316, %c0_91] : memref<16x256xf32, #tpu.memory_space<vmem>>, vector<2x256xf32>
    %cst_92 = arith.constant dense<0.000000e+00> : vector<2x256xf32>
    %318 = tpu.matmul %277, %11, %cst_92 {dimension_numbers = #tpu.dot_dimension_numbers<[1], [0], [0], [1], [0, 0, 1, 1], [], []>} : vector<2x64xf32>, vector<64x256xf32>, vector<2x256xf32> -> vector<2x256xf32>
    %319 = arith.addf %317, %318 : vector<2x256xf32>
    %320 = vector.extract_strided_slice %319 {offsets = [0, 0], sizes = [2, 64], strides = [1, 1]} : vector<2x256xf32> to vector<2x64xf32>
    %321 = arith.negf %320 : vector<2x64xf32>
    %322 = math.exp %321 : vector<2x64xf32>
    %cst_93 = arith.constant 1.000000e+00 : f32
    %323 = vector.broadcast %cst_93 : f32 to vector<2x64xf32>
    %324 = arith.addf %323, %322 : vector<2x64xf32>
    %325 = arith.divf %323, %324 : vector<2x64xf32>
    %326 = vector.extract_strided_slice %319 {offsets = [0, 64], sizes = [2, 64], strides = [1, 1]} : vector<2x256xf32> to vector<2x64xf32>
    %327 = arith.negf %326 : vector<2x64xf32>
    %328 = math.exp %327 : vector<2x64xf32>
    %cst_94 = arith.constant 1.000000e+00 : f32
    %329 = vector.broadcast %cst_94 : f32 to vector<2x64xf32>
    %330 = arith.addf %329, %328 : vector<2x64xf32>
    %331 = arith.divf %329, %330 : vector<2x64xf32>
    %332 = vector.extract_strided_slice %319 {offsets = [0, 128], sizes = [2, 64], strides = [1, 1]} : vector<2x256xf32> to vector<2x64xf32>
    %333 = math.tanh %332 : vector<2x64xf32>
    %334 = vector.extract_strided_slice %319 {offsets = [0, 192], sizes = [2, 64], strides = [1, 1]} : vector<2x256xf32> to vector<2x64xf32>
    %335 = arith.negf %334 : vector<2x64xf32>
    %336 = math.exp %335 : vector<2x64xf32>
    %cst_95 = arith.constant 1.000000e+00 : f32
    %337 = vector.broadcast %cst_95 : f32 to vector<2x64xf32>
    %338 = arith.addf %337, %336 : vector<2x64xf32>
    %339 = arith.divf %337, %338 : vector<2x64xf32>
    %340 = arith.mulf %331, %275 : vector<2x64xf32>
    %341 = arith.mulf %325, %333 : vector<2x64xf32>
    %342 = arith.addf %340, %341 : vector<2x64xf32>
    %343 = math.tanh %342 : vector<2x64xf32>
    %344 = arith.mulf %339, %343 : vector<2x64xf32>
    %c2_i32_96 = arith.constant 2 : i32
    %345 = arith.muli %281, %c2_i32_96 : i32
    %346 = arith.index_cast %345 : i32 to index
    %c0_97 = arith.constant 0 : index
    %347 = vector.load %arg11[%346, %c0_97] : memref<16x64xf32, #tpu.memory_space<vmem>>, vector<2x64xf32>
    tpu.vector_store %arg11[%346, %c0_97], %344 {strides = array<i32>} : memref<16x64xf32, #tpu.memory_space<vmem>>, vector<2x64xf32>,
    %c5_i32 = arith.constant 5 : i32
    %c7_i32_98 = arith.constant 7 : i32
    %348 = arith.subi %c7_i32_98, %c5_i32 : i32
    %c2_i32_99 = arith.constant 2 : i32
    %349 = arith.muli %c5_i32, %c2_i32_99 : i32
    %350 = arith.index_cast %349 : i32 to index
    %c0_100 = arith.constant 0 : index
    %351 = vector.load %arg8[%350, %c0_100] : memref<16x256xf32, #tpu.memory_space<vmem>>, vector<2x256xf32>
    %cst_101 = arith.constant dense<0.000000e+00> : vector<2x256xf32>
    %352 = tpu.matmul %311, %10, %cst_101 {dimension_numbers = #tpu.dot_dimension_numbers<[1], [0], [0], [1], [0, 0, 1, 1], [], []>} : vector<2x64xf32>, vector<64x256xf32>, vector<2x256xf32> -> vector<2x256xf32>
    %353 = arith.addf %351, %352 : vector<2x256xf32>
    %354 = vector.extract_strided_slice %353 {offsets = [0, 0], sizes = [2, 64], strides = [1, 1]} : vector<2x256xf32> to vector<2x64xf32>
    %355 = arith.negf %354 : vector<2x64xf32>
    %356 = math.exp %355 : vector<2x64xf32>
    %cst_102 = arith.constant 1.000000e+00 : f32
    %357 = vector.broadcast %cst_102 : f32 to vector<2x64xf32>
    %358 = arith.addf %357, %356 : vector<2x64xf32>
    %359 = arith.divf %357, %358 : vector<2x64xf32>
    %360 = vector.extract_strided_slice %353 {offsets = [0, 64], sizes = [2, 64], strides = [1, 1]} : vector<2x256xf32> to vector<2x64xf32>
    %361 = arith.negf %360 : vector<2x64xf32>
    %362 = math.exp %361 : vector<2x64xf32>
    %cst_103 = arith.constant 1.000000e+00 : f32
    %363 = vector.broadcast %cst_103 : f32 to vector<2x64xf32>
    %364 = arith.addf %363, %362 : vector<2x64xf32>
    %365 = arith.divf %363, %364 : vector<2x64xf32>
    %366 = vector.extract_strided_slice %353 {offsets = [0, 128], sizes = [2, 64], strides = [1, 1]} : vector<2x256xf32> to vector<2x64xf32>
    %367 = math.tanh %366 : vector<2x64xf32>
    %368 = vector.extract_strided_slice %353 {offsets = [0, 192], sizes = [2, 64], strides = [1, 1]} : vector<2x256xf32> to vector<2x64xf32>
    %369 = arith.negf %368 : vector<2x64xf32>
    %370 = math.exp %369 : vector<2x64xf32>
    %cst_104 = arith.constant 1.000000e+00 : f32
    %371 = vector.broadcast %cst_104 : f32 to vector<2x64xf32>
    %372 = arith.addf %371, %370 : vector<2x64xf32>
    %373 = arith.divf %371, %372 : vector<2x64xf32>
    %374 = arith.mulf %365, %309 : vector<2x64xf32>
    %375 = arith.mulf %359, %367 : vector<2x64xf32>
    %376 = arith.addf %374, %375 : vector<2x64xf32>
    %377 = math.tanh %376 : vector<2x64xf32>
    %378 = arith.mulf %373, %377 : vector<2x64xf32>
    %c2_i32_105 = arith.constant 2 : i32
    %379 = arith.muli %c5_i32, %c2_i32_105 : i32
    %380 = arith.index_cast %379 : i32 to index
    %c0_106 = arith.constant 0 : index
    %381 = vector.load %arg10[%380, %c0_106] : memref<16x64xf32, #tpu.memory_space<vmem>>, vector<2x64xf32>
    tpu.vector_store %arg10[%380, %c0_106], %378 {strides = array<i32>} : memref<16x64xf32, #tpu.memory_space<vmem>>, vector<2x64xf32>,
    %c2_i32_107 = arith.constant 2 : i32
    %382 = arith.muli %348, %c2_i32_107 : i32
    %383 = arith.index_cast %382 : i32 to index
    %c0_108 = arith.constant 0 : index
    %384 = vector.load %arg9[%383, %c0_108] : memref<16x256xf32, #tpu.memory_space<vmem>>, vector<2x256xf32>
    %cst_109 = arith.constant dense<0.000000e+00> : vector<2x256xf32>
    %385 = tpu.matmul %344, %11, %cst_109 {dimension_numbers = #tpu.dot_dimension_numbers<[1], [0], [0], [1], [0, 0, 1, 1], [], []>} : vector<2x64xf32>, vector<64x256xf32>, vector<2x256xf32> -> vector<2x256xf32>
    %386 = arith.addf %384, %385 : vector<2x256xf32>
    %387 = vector.extract_strided_slice %386 {offsets = [0, 0], sizes = [2, 64], strides = [1, 1]} : vector<2x256xf32> to vector<2x64xf32>
    %388 = arith.negf %387 : vector<2x64xf32>
    %389 = math.exp %388 : vector<2x64xf32>
    %cst_110 = arith.constant 1.000000e+00 : f32
    %390 = vector.broadcast %cst_110 : f32 to vector<2x64xf32>
    %391 = arith.addf %390, %389 : vector<2x64xf32>
    %392 = arith.divf %390, %391 : vector<2x64xf32>
    %393 = vector.extract_strided_slice %386 {offsets = [0, 64], sizes = [2, 64], strides = [1, 1]} : vector<2x256xf32> to vector<2x64xf32>
    %394 = arith.negf %393 : vector<2x64xf32>
    %395 = math.exp %394 : vector<2x64xf32>
    %cst_111 = arith.constant 1.000000e+00 : f32
    %396 = vector.broadcast %cst_111 : f32 to vector<2x64xf32>
    %397 = arith.addf %396, %395 : vector<2x64xf32>
    %398 = arith.divf %396, %397 : vector<2x64xf32>
    %399 = vector.extract_strided_slice %386 {offsets = [0, 128], sizes = [2, 64], strides = [1, 1]} : vector<2x256xf32> to vector<2x64xf32>
    %400 = math.tanh %399 : vector<2x64xf32>
    %401 = vector.extract_strided_slice %386 {offsets = [0, 192], sizes = [2, 64], strides = [1, 1]} : vector<2x256xf32> to vector<2x64xf32>
    %402 = arith.negf %401 : vector<2x64xf32>
    %403 = math.exp %402 : vector<2x64xf32>
    %cst_112 = arith.constant 1.000000e+00 : f32
    %404 = vector.broadcast %cst_112 : f32 to vector<2x64xf32>
    %405 = arith.addf %404, %403 : vector<2x64xf32>
    %406 = arith.divf %404, %405 : vector<2x64xf32>
    %407 = arith.mulf %398, %342 : vector<2x64xf32>
    %408 = arith.mulf %392, %400 : vector<2x64xf32>
    %409 = arith.addf %407, %408 : vector<2x64xf32>
    %410 = math.tanh %409 : vector<2x64xf32>
    %411 = arith.mulf %406, %410 : vector<2x64xf32>
    %c2_i32_113 = arith.constant 2 : i32
    %412 = arith.muli %348, %c2_i32_113 : i32
    %413 = arith.index_cast %412 : i32 to index
    %c0_114 = arith.constant 0 : index
    %414 = vector.load %arg11[%413, %c0_114] : memref<16x64xf32, #tpu.memory_space<vmem>>, vector<2x64xf32>
    tpu.vector_store %arg11[%413, %c0_114], %411 {strides = array<i32>} : memref<16x64xf32, #tpu.memory_space<vmem>>, vector<2x64xf32>,
    %c6_i32 = arith.constant 6 : i32
    %c7_i32_115 = arith.constant 7 : i32
    %415 = arith.subi %c7_i32_115, %c6_i32 : i32
    %c2_i32_116 = arith.constant 2 : i32
    %416 = arith.muli %c6_i32, %c2_i32_116 : i32
    %417 = arith.index_cast %416 : i32 to index
    %c0_117 = arith.constant 0 : index
    %418 = vector.load %arg8[%417, %c0_117] : memref<16x256xf32, #tpu.memory_space<vmem>>, vector<2x256xf32>
    %cst_118 = arith.constant dense<0.000000e+00> : vector<2x256xf32>
    %419 = tpu.matmul %378, %10, %cst_118 {dimension_numbers = #tpu.dot_dimension_numbers<[1], [0], [0], [1], [0, 0, 1, 1], [], []>} : vector<2x64xf32>, vector<64x256xf32>, vector<2x256xf32> -> vector<2x256xf32>
    %420 = arith.addf %418, %419 : vector<2x256xf32>
    %421 = vector.extract_strided_slice %420 {offsets = [0, 0], sizes = [2, 64], strides = [1, 1]} : vector<2x256xf32> to vector<2x64xf32>
    %422 = arith.negf %421 : vector<2x64xf32>
    %423 = math.exp %422 : vector<2x64xf32>
    %cst_119 = arith.constant 1.000000e+00 : f32
    %424 = vector.broadcast %cst_119 : f32 to vector<2x64xf32>
    %425 = arith.addf %424, %423 : vector<2x64xf32>
    %426 = arith.divf %424, %425 : vector<2x64xf32>
    %427 = vector.extract_strided_slice %420 {offsets = [0, 64], sizes = [2, 64], strides = [1, 1]} : vector<2x256xf32> to vector<2x64xf32>
    %428 = arith.negf %427 : vector<2x64xf32>
    %429 = math.exp %428 : vector<2x64xf32>
    %cst_120 = arith.constant 1.000000e+00 : f32
    %430 = vector.broadcast %cst_120 : f32 to vector<2x64xf32>
    %431 = arith.addf %430, %429 : vector<2x64xf32>
    %432 = arith.divf %430, %431 : vector<2x64xf32>
    %433 = vector.extract_strided_slice %420 {offsets = [0, 128], sizes = [2, 64], strides = [1, 1]} : vector<2x256xf32> to vector<2x64xf32>
    %434 = math.tanh %433 : vector<2x64xf32>
    %435 = vector.extract_strided_slice %420 {offsets = [0, 192], sizes = [2, 64], strides = [1, 1]} : vector<2x256xf32> to vector<2x64xf32>
    %436 = arith.negf %435 : vector<2x64xf32>
    %437 = math.exp %436 : vector<2x64xf32>
    %cst_121 = arith.constant 1.000000e+00 : f32
    %438 = vector.broadcast %cst_121 : f32 to vector<2x64xf32>
    %439 = arith.addf %438, %437 : vector<2x64xf32>
    %440 = arith.divf %438, %439 : vector<2x64xf32>
    %441 = arith.mulf %432, %376 : vector<2x64xf32>
    %442 = arith.mulf %426, %434 : vector<2x64xf32>
    %443 = arith.addf %441, %442 : vector<2x64xf32>
    %444 = math.tanh %443 : vector<2x64xf32>
    %445 = arith.mulf %440, %444 : vector<2x64xf32>
    %c2_i32_122 = arith.constant 2 : i32
    %446 = arith.muli %c6_i32, %c2_i32_122 : i32
    %447 = arith.index_cast %446 : i32 to index
    %c0_123 = arith.constant 0 : index
    %448 = vector.load %arg10[%447, %c0_123] : memref<16x64xf32, #tpu.memory_space<vmem>>, vector<2x64xf32>
    tpu.vector_store %arg10[%447, %c0_123], %445 {strides = array<i32>} : memref<16x64xf32, #tpu.memory_space<vmem>>, vector<2x64xf32>,
    %c2_i32_124 = arith.constant 2 : i32
    %449 = arith.muli %415, %c2_i32_124 : i32
    %450 = arith.index_cast %449 : i32 to index
    %c0_125 = arith.constant 0 : index
    %451 = vector.load %arg9[%450, %c0_125] : memref<16x256xf32, #tpu.memory_space<vmem>>, vector<2x256xf32>
    %cst_126 = arith.constant dense<0.000000e+00> : vector<2x256xf32>
    %452 = tpu.matmul %411, %11, %cst_126 {dimension_numbers = #tpu.dot_dimension_numbers<[1], [0], [0], [1], [0, 0, 1, 1], [], []>} : vector<2x64xf32>, vector<64x256xf32>, vector<2x256xf32> -> vector<2x256xf32>
    %453 = arith.addf %451, %452 : vector<2x256xf32>
    %454 = vector.extract_strided_slice %453 {offsets = [0, 0], sizes = [2, 64], strides = [1, 1]} : vector<2x256xf32> to vector<2x64xf32>
    %455 = arith.negf %454 : vector<2x64xf32>
    %456 = math.exp %455 : vector<2x64xf32>
    %cst_127 = arith.constant 1.000000e+00 : f32
    %457 = vector.broadcast %cst_127 : f32 to vector<2x64xf32>
    %458 = arith.addf %457, %456 : vector<2x64xf32>
    %459 = arith.divf %457, %458 : vector<2x64xf32>
    %460 = vector.extract_strided_slice %453 {offsets = [0, 64], sizes = [2, 64], strides = [1, 1]} : vector<2x256xf32> to vector<2x64xf32>
    %461 = arith.negf %460 : vector<2x64xf32>
    %462 = math.exp %461 : vector<2x64xf32>
    %cst_128 = arith.constant 1.000000e+00 : f32
    %463 = vector.broadcast %cst_128 : f32 to vector<2x64xf32>
    %464 = arith.addf %463, %462 : vector<2x64xf32>
    %465 = arith.divf %463, %464 : vector<2x64xf32>
    %466 = vector.extract_strided_slice %453 {offsets = [0, 128], sizes = [2, 64], strides = [1, 1]} : vector<2x256xf32> to vector<2x64xf32>
    %467 = math.tanh %466 : vector<2x64xf32>
    %468 = vector.extract_strided_slice %453 {offsets = [0, 192], sizes = [2, 64], strides = [1, 1]} : vector<2x256xf32> to vector<2x64xf32>
    %469 = arith.negf %468 : vector<2x64xf32>
    %470 = math.exp %469 : vector<2x64xf32>
    %cst_129 = arith.constant 1.000000e+00 : f32
    %471 = vector.broadcast %cst_129 : f32 to vector<2x64xf32>
    %472 = arith.addf %471, %470 : vector<2x64xf32>
    %473 = arith.divf %471, %472 : vector<2x64xf32>
    %474 = arith.mulf %465, %409 : vector<2x64xf32>
    %475 = arith.mulf %459, %467 : vector<2x64xf32>
    %476 = arith.addf %474, %475 : vector<2x64xf32>
    %477 = math.tanh %476 : vector<2x64xf32>
    %478 = arith.mulf %473, %477 : vector<2x64xf32>
    %c2_i32_130 = arith.constant 2 : i32
    %479 = arith.muli %415, %c2_i32_130 : i32
    %480 = arith.index_cast %479 : i32 to index
    %c0_131 = arith.constant 0 : index
    %481 = vector.load %arg11[%480, %c0_131] : memref<16x64xf32, #tpu.memory_space<vmem>>, vector<2x64xf32>
    tpu.vector_store %arg11[%480, %c0_131], %478 {strides = array<i32>} : memref<16x64xf32, #tpu.memory_space<vmem>>, vector<2x64xf32>,
    %c7_i32_132 = arith.constant 7 : i32
    %c7_i32_133 = arith.constant 7 : i32
    %482 = arith.subi %c7_i32_133, %c7_i32_132 : i32
    %c2_i32_134 = arith.constant 2 : i32
    %483 = arith.muli %c7_i32_132, %c2_i32_134 : i32
    %484 = arith.index_cast %483 : i32 to index
    %c0_135 = arith.constant 0 : index
    %485 = vector.load %arg8[%484, %c0_135] : memref<16x256xf32, #tpu.memory_space<vmem>>, vector<2x256xf32>
    %cst_136 = arith.constant dense<0.000000e+00> : vector<2x256xf32>
    %486 = tpu.matmul %445, %10, %cst_136 {dimension_numbers = #tpu.dot_dimension_numbers<[1], [0], [0], [1], [0, 0, 1, 1], [], []>} : vector<2x64xf32>, vector<64x256xf32>, vector<2x256xf32> -> vector<2x256xf32>
    %487 = arith.addf %485, %486 : vector<2x256xf32>
    %488 = vector.extract_strided_slice %487 {offsets = [0, 0], sizes = [2, 64], strides = [1, 1]} : vector<2x256xf32> to vector<2x64xf32>
    %489 = arith.negf %488 : vector<2x64xf32>
    %490 = math.exp %489 : vector<2x64xf32>
    %cst_137 = arith.constant 1.000000e+00 : f32
    %491 = vector.broadcast %cst_137 : f32 to vector<2x64xf32>
    %492 = arith.addf %491, %490 : vector<2x64xf32>
    %493 = arith.divf %491, %492 : vector<2x64xf32>
    %494 = vector.extract_strided_slice %487 {offsets = [0, 64], sizes = [2, 64], strides = [1, 1]} : vector<2x256xf32> to vector<2x64xf32>
    %495 = arith.negf %494 : vector<2x64xf32>
    %496 = math.exp %495 : vector<2x64xf32>
    %cst_138 = arith.constant 1.000000e+00 : f32
    %497 = vector.broadcast %cst_138 : f32 to vector<2x64xf32>
    %498 = arith.addf %497, %496 : vector<2x64xf32>
    %499 = arith.divf %497, %498 : vector<2x64xf32>
    %500 = vector.extract_strided_slice %487 {offsets = [0, 128], sizes = [2, 64], strides = [1, 1]} : vector<2x256xf32> to vector<2x64xf32>
    %501 = math.tanh %500 : vector<2x64xf32>
    %502 = vector.extract_strided_slice %487 {offsets = [0, 192], sizes = [2, 64], strides = [1, 1]} : vector<2x256xf32> to vector<2x64xf32>
    %503 = arith.negf %502 : vector<2x64xf32>
    %504 = math.exp %503 : vector<2x64xf32>
    %cst_139 = arith.constant 1.000000e+00 : f32
    %505 = vector.broadcast %cst_139 : f32 to vector<2x64xf32>
    %506 = arith.addf %505, %504 : vector<2x64xf32>
    %507 = arith.divf %505, %506 : vector<2x64xf32>
    %508 = arith.mulf %499, %443 : vector<2x64xf32>
    %509 = arith.mulf %493, %501 : vector<2x64xf32>
    %510 = arith.addf %508, %509 : vector<2x64xf32>
    %511 = math.tanh %510 : vector<2x64xf32>
    %512 = arith.mulf %507, %511 : vector<2x64xf32>
    %c2_i32_140 = arith.constant 2 : i32
    %513 = arith.muli %c7_i32_132, %c2_i32_140 : i32
    %514 = arith.index_cast %513 : i32 to index
    %c0_141 = arith.constant 0 : index
    %515 = vector.load %arg10[%514, %c0_141] : memref<16x64xf32, #tpu.memory_space<vmem>>, vector<2x64xf32>
    tpu.vector_store %arg10[%514, %c0_141], %512 {strides = array<i32>} : memref<16x64xf32, #tpu.memory_space<vmem>>, vector<2x64xf32>,
    %c2_i32_142 = arith.constant 2 : i32
    %516 = arith.muli %482, %c2_i32_142 : i32
    %517 = arith.index_cast %516 : i32 to index
    %c0_143 = arith.constant 0 : index
    %518 = vector.load %arg9[%517, %c0_143] : memref<16x256xf32, #tpu.memory_space<vmem>>, vector<2x256xf32>
    %cst_144 = arith.constant dense<0.000000e+00> : vector<2x256xf32>
    %519 = tpu.matmul %478, %11, %cst_144 {dimension_numbers = #tpu.dot_dimension_numbers<[1], [0], [0], [1], [0, 0, 1, 1], [], []>} : vector<2x64xf32>, vector<64x256xf32>, vector<2x256xf32> -> vector<2x256xf32>
    %520 = arith.addf %518, %519 : vector<2x256xf32>
    %521 = vector.extract_strided_slice %520 {offsets = [0, 0], sizes = [2, 64], strides = [1, 1]} : vector<2x256xf32> to vector<2x64xf32>
    %522 = arith.negf %521 : vector<2x64xf32>
    %523 = math.exp %522 : vector<2x64xf32>
    %cst_145 = arith.constant 1.000000e+00 : f32
    %524 = vector.broadcast %cst_145 : f32 to vector<2x64xf32>
    %525 = arith.addf %524, %523 : vector<2x64xf32>
    %526 = arith.divf %524, %525 : vector<2x64xf32>
    %527 = vector.extract_strided_slice %520 {offsets = [0, 64], sizes = [2, 64], strides = [1, 1]} : vector<2x256xf32> to vector<2x64xf32>
    %528 = arith.negf %527 : vector<2x64xf32>
    %529 = math.exp %528 : vector<2x64xf32>
    %cst_146 = arith.constant 1.000000e+00 : f32
    %530 = vector.broadcast %cst_146 : f32 to vector<2x64xf32>
    %531 = arith.addf %530, %529 : vector<2x64xf32>
    %532 = arith.divf %530, %531 : vector<2x64xf32>
    %533 = vector.extract_strided_slice %520 {offsets = [0, 128], sizes = [2, 64], strides = [1, 1]} : vector<2x256xf32> to vector<2x64xf32>
    %534 = math.tanh %533 : vector<2x64xf32>
    %535 = vector.extract_strided_slice %520 {offsets = [0, 192], sizes = [2, 64], strides = [1, 1]} : vector<2x256xf32> to vector<2x64xf32>
    %536 = arith.negf %535 : vector<2x64xf32>
    %537 = math.exp %536 : vector<2x64xf32>
    %cst_147 = arith.constant 1.000000e+00 : f32
    %538 = vector.broadcast %cst_147 : f32 to vector<2x64xf32>
    %539 = arith.addf %538, %537 : vector<2x64xf32>
    %540 = arith.divf %538, %539 : vector<2x64xf32>
    %541 = arith.mulf %532, %476 : vector<2x64xf32>
    %542 = arith.mulf %526, %534 : vector<2x64xf32>
    %543 = arith.addf %541, %542 : vector<2x64xf32>
    %544 = math.tanh %543 : vector<2x64xf32>
    %545 = arith.mulf %540, %544 : vector<2x64xf32>
    %c2_i32_148 = arith.constant 2 : i32
    %546 = arith.muli %482, %c2_i32_148 : i32
    %547 = arith.index_cast %546 : i32 to index
    %c0_149 = arith.constant 0 : index
    %548 = vector.load %arg11[%547, %c0_149] : memref<16x64xf32, #tpu.memory_space<vmem>>, vector<2x64xf32>
    tpu.vector_store %arg11[%547, %c0_149], %545 {strides = array<i32>} : memref<16x64xf32, #tpu.memory_space<vmem>>, vector<2x64xf32>,
    %c8_i32 = arith.constant 8 : i32
    %c0_150 = arith.constant 0 : index
    %c0_151 = arith.constant 0 : index
    %549 = vector.load %arg10[%c0_150, %c0_151] : memref<16x64xf32, #tpu.memory_space<vmem>>, vector<16x64xf32>
    %c0_152 = arith.constant 0 : index
    %c0_153 = arith.constant 0 : index
    %550 = vector.load %arg5[%c0_152, %c0_153] : memref<64x64xf32, #tpu.memory_space<vmem>>, vector<64x64xf32>
    %cst_154 = arith.constant dense<0.000000e+00> : vector<16x64xf32>
    %551 = tpu.matmul %549, %550, %cst_154 {dimension_numbers = #tpu.dot_dimension_numbers<[1], [0], [0], [1], [0, 0, 1, 1], [], []>} : vector<16x64xf32>, vector<64x64xf32>, vector<16x64xf32> -> vector<16x64xf32>
    %c0_155 = arith.constant 0 : index
    %c0_156 = arith.constant 0 : index
    %552 = vector.load %arg11[%c0_155, %c0_156] : memref<16x64xf32, #tpu.memory_space<vmem>>, vector<16x64xf32>
    %c0_157 = arith.constant 0 : index
    %c0_158 = arith.constant 0 : index
    %553 = vector.load %arg6[%c0_157, %c0_158] : memref<64x64xf32, #tpu.memory_space<vmem>>, vector<64x64xf32>
    %cst_159 = arith.constant dense<0.000000e+00> : vector<16x64xf32>
    %554 = tpu.matmul %552, %553, %cst_159 {dimension_numbers = #tpu.dot_dimension_numbers<[1], [0], [0], [1], [0, 0, 1, 1], [], []>} : vector<16x64xf32>, vector<64x64xf32>, vector<16x64xf32> -> vector<16x64xf32>
    %555 = arith.addf %551, %554 : vector<16x64xf32>
    %c0_160 = arith.constant 0 : index
    %c0_161 = arith.constant 0 : index
    %556 = vector.load %arg7[%c0_160, %c0_161] : memref<16x64xf32, #tpu.memory_space<vmem>>, vector<16x64xf32>
    tpu.vector_store %arg7[%c0_160, %c0_161], %555 {strides = array<i32>} : memref<16x64xf32, #tpu.memory_space<vmem>>, vector<16x64xf32>,
    return
  }
}

</mosaic_0001>

<llo_original>
// kernel: rnnstack_forward.1
$region0: #{rnnstack_forward.1}
  #allocation0 [shape = 'u32[]', space=smem, size = 0x4, offset = 0x4, fixed_abs, tag = 'smem constant byte address 0x4 - core index']
  #allocation1 [shape = 'u32[72,128]{1,0:T(1,128)}', space=vmem, size = 0x9000, scoped, tag = 'internal scratch']
  #allocation2 [shape = 'f32[16,256]{1,0:T(8,128)}', space=vmem, size = 0x4000, scoped, tag = 'scratch operand']
  #allocation3 [shape = 'f32[16,256]{1,0:T(8,128)}', space=vmem, size = 0x4000, scoped, tag = 'scratch operand']
  #allocation4 [shape = 'f32[16,64]{1,0:T(8,128)}', space=vmem, size = 0x2000, scoped, tag = 'scratch operand']
  #allocation5 [shape = 'f32[16,64]{1,0:T(8,128)}', space=vmem, size = 0x2000, scoped, tag = 'scratch operand']
  %s0 = inlined_call_operand.vmem [shape: f32[16,16], index: 0, kind: input, shape index: {}]
  %s1 = inlined_call_operand.vmem [shape: f32[16,512], index: 1, kind: input, shape index: {}]
  %s2 = inlined_call_operand.vmem [shape: f32[64,256], index: 2, kind: input, shape index: {}]
  %s3 = inlined_call_operand.vmem [shape: f32[64,256], index: 3, kind: input, shape index: {}]
  %s4 = inlined_call_operand.vmem [shape: f32[1,512], index: 4, kind: input, shape index: {}]
  %s5 = inlined_call_operand.vmem [shape: f32[64,64], index: 5, kind: input, shape index: {}]
  %s6 = inlined_call_operand.vmem [shape: f32[64,64], index: 6, kind: input, shape index: {}]
  %s7 = inlined_call_operand.vmem [shape: f32[16,64], index: 7, kind: output, shape index: {}]
  %s8 = sld [smem:[#allocation0]]
  $region38: #{rnnstack_forward.1} parent=0
    _
  %s10 = ssub.s32 1, %s8
  %s11 = scalar_select 0, %s10, %s8
  // Predicated region
  $region2: #{rnnstack_forward.1} parent=0 // pred_check
    _
  $region3: #{rnnstack_forward.1} parent=0 // pred_check_branch
    %13 = sbr.rel (0) target = $region5
  $region4: #{rnnstack_forward.1} parent=0 // pred_region
    _
  $region5: #{rnnstack_forward.1} parent=0 // pred_fallthru
    _
  // Predicated region
  $region6: #{rnnstack_forward.1} parent=0 // pred_check
    _
  $region7: #{rnnstack_forward.1} parent=0 // pred_check_branch
    %15 = sbr.rel (0) target = $region9
  $region8: #{rnnstack_forward.1} parent=0 // pred_region
    _
  $region9: #{rnnstack_forward.1} parent=0 // pred_fallthru
    _
  // Predicated region
  $region10: #{rnnstack_forward.1} parent=0 // pred_check
    _
  $region11: #{rnnstack_forward.1} parent=0 // pred_check_branch
    %17 = sbr.rel (0) target = $region13
  $region12: #{rnnstack_forward.1} parent=0 // pred_region
    _
  $region13: #{rnnstack_forward.1} parent=0 // pred_fallthru
    _
  // Predicated region
  $region14: #{rnnstack_forward.1} parent=0 // pred_check
    _
  $region15: #{rnnstack_forward.1} parent=0 // pred_check_branch
    %19 = sbr.rel (0) target = $region17
  $region16: #{rnnstack_forward.1} parent=0 // pred_region
    _
  $region17: #{rnnstack_forward.1} parent=0 // pred_fallthru
    _
  // Predicated region
  $region18: #{rnnstack_forward.1} parent=0 // pred_check
    _
  $region19: #{rnnstack_forward.1} parent=0 // pred_check_branch
    %21 = sbr.rel (0) target = $region21
  $region20: #{rnnstack_forward.1} parent=0 // pred_region
    _
  $region21: #{rnnstack_forward.1} parent=0 // pred_fallthru
    _
  // Predicated region
  $region22: #{rnnstack_forward.1} parent=0 // pred_check
    _
  $region23: #{rnnstack_forward.1} parent=0 // pred_check_branch
    %23 = sbr.rel (0) target = $region25
  $region24: #{rnnstack_forward.1} parent=0 // pred_region
    _
  $region25: #{rnnstack_forward.1} parent=0 // pred_fallthru
    _
  // Predicated region
  $region26: #{rnnstack_forward.1} parent=0 // pred_check
    _
  $region27: #{rnnstack_forward.1} parent=0 // pred_check_branch
    %25 = sbr.rel (0) target = $region29
  $region28: #{rnnstack_forward.1} parent=0 // pred_region
    _
  $region29: #{rnnstack_forward.1} parent=0 // pred_fallthru
    _
  %v26 = vld [vmem:[%s0] sm:$0xff]
  %v27 = vld [vmem:[%s0 + $0x8] sm:$0xff]
  %v28 = vld [vmem:[%s1] sm:$0xff]
  %v29 = vld [vmem:[%s1 + $0x8] sm:$0xff]
  %v30 = vld [vmem:[%s1 + $0x10] sm:$0xff]
  %v31 = vld [vmem:[%s1 + $0x18] sm:$0xff]
  %v32 = vld [vmem:[%s1 + $0x20] sm:$0xff]
  %v33 = vld [vmem:[%s1 + $0x28] sm:$0xff]
  %v34 = vld [vmem:[%s1 + $0x30] sm:$0xff]
  %v35 = vld [vmem:[%s1 + $0x38] sm:$0xff]
  %v36 = vld [vmem:[%s4] sm:$0xf]
  %v38 = vperm.slane %v36, 0
  %v39 = vperm.slane %v36, 1
  %v40 = vperm.slane %v36, 2
  %v41 = vperm.slane %v36, 3
  %vm46 = vcmask 130048
  %v48 = vsel %vm46, %v26, 0
  %v51 = vsel %vm46, %v27, 0
  %53 = vmatpush.msra.mxu0 0.0
  %54 = vmatpush.msra.mxu0 0.0
  %55 = vmatpush.msra.mxu0 0.0
  %56 = vmatpush.msra.mxu0 0.0
  %57 = vmatpush.msra.mxu0 0.0
  %58 = vmatpush.msra.mxu0 0.0
  %59 = vmatpush.msra.mxu0 0.0
  %60 = vmatpush.msra.mxu0 0.0
  %61 = vmatpush.msra.mxu0 0.0
  %62 = vmatpush.msra.mxu0 0.0
  %63 = vmatpush.msra.mxu0 0.0
  %64 = vmatpush.msra.mxu0 0.0
  %65 = vmatpush.msra.mxu0 0.0
  %66 = vmatpush.msra.mxu0 0.0
  %67 = vmatpush.msra.mxu0 %v32
  %68 = vmatpush.msra.mxu0 %v28
  %69 = vmatmul.f32.gmra.mxu0 %v48
  %v70 = vpop.f32.mrf.mxu0
  %v71 = vadd.f32 %v38, %v70
  %72 = vmatmul.f32.gmra.mxu0 %v51
  %v73 = vpop.f32.mrf.mxu0
  %v74 = vadd.f32 %v38, %v73
  %75 = vdwg.mxu0
  %76 = vmatpush.msra.mxu0 0.0
  %77 = vmatpush.msra.mxu0 0.0
  %78 = vmatpush.msra.mxu0 0.0
  %79 = vmatpush.msra.mxu0 0.0
  %80 = vmatpush.msra.mxu0 0.0
  %81 = vmatpush.msra.mxu0 0.0
  %82 = vmatpush.msra.mxu0 0.0
  %83 = vmatpush.msra.mxu0 0.0
  %84 = vmatpush.msra.mxu0 0.0
  %85 = vmatpush.msra.mxu0 0.0
  %86 = vmatpush.msra.mxu0 0.0
  %87 = vmatpush.msra.mxu0 0.0
  %88 = vmatpush.msra.mxu0 0.0
  %89 = vmatpush.msra.mxu0 0.0
  %90 = vmatpush.msra.mxu0 %v33
  %91 = vmatpush.msra.mxu0 %v29
  %92 = vmatmul.f32.gmra.mxu0 %v48
  %v93 = vpop.f32.mrf.mxu0
  %v94 = vadd.f32 %v39, %v93
  %95 = vmatmul.f32.gmra.mxu0 %v51
  %v96 = vpop.f32.mrf.mxu0
  %v97 = vadd.f32 %v39, %v96
  %98 = vdwg.mxu0
  %99 = vmatpush.msra.mxu0 0.0
  %100 = vmatpush.msra.mxu0 0.0
  %101 = vmatpush.msra.mxu0 0.0
  %102 = vmatpush.msra.mxu0 0.0
  %103 = vmatpush.msra.mxu0 0.0
  %104 = vmatpush.msra.mxu0 0.0
  %105 = vmatpush.msra.mxu0 0.0
  %106 = vmatpush.msra.mxu0 0.0
  %107 = vmatpush.msra.mxu0 0.0
  %108 = vmatpush.msra.mxu0 0.0
  %109 = vmatpush.msra.mxu0 0.0
  %110 = vmatpush.msra.mxu0 0.0
  %111 = vmatpush.msra.mxu0 0.0
  %112 = vmatpush.msra.mxu0 0.0
  %113 = vmatpush.msra.mxu0 %v34
  %114 = vmatpush.msra.mxu0 %v30
  %115 = vmatmul.f32.gmra.mxu0 %v48
  %v116 = vpop.f32.mrf.mxu0
  %v117 = vadd.f32 %v40, %v116
  %118 = vmatmul.f32.gmra.mxu0 %v51
  %v119 = vpop.f32.mrf.mxu0
  %v120 = vadd.f32 %v40, %v119
  %121 = vdwg.mxu0
  %122 = vmatpush.msra.mxu0 0.0
  %123 = vmatpush.msra.mxu0 0.0
  %124 = vmatpush.msra.mxu0 0.0
  %125 = vmatpush.msra.mxu0 0.0
  %126 = vmatpush.msra.mxu0 0.0
  %127 = vmatpush.msra.mxu0 0.0
  %128 = vmatpush.msra.mxu0 0.0
  %129 = vmatpush.msra.mxu0 0.0
  %130 = vmatpush.msra.mxu0 0.0
  %131 = vmatpush.msra.mxu0 0.0
  %132 = vmatpush.msra.mxu0 0.0
  %133 = vmatpush.msra.mxu0 0.0
  %134 = vmatpush.msra.mxu0 0.0
  %135 = vmatpush.msra.mxu0 0.0
  %136 = vmatpush.msra.mxu0 %v35
  %137 = vmatpush.msra.mxu0 %v31
  %138 = vmatmul.f32.gmra.mxu0 %v48
  %v139 = vpop.f32.mrf.mxu0
  %v140 = vadd.f32 %v41, %v139
  %141 = vmatmul.f32.gmra.mxu0 %v51
  %v142 = vpop.f32.mrf.mxu0
  %v143 = vadd.f32 %v41, %v142
  %144 = vdwg.mxu0
  %145 = vst [vmem:[#allocation2] sm:$0xff] %v71
  %146 = vst [vmem:[#allocation2 + $0x8] sm:$0xff] %v94
  %147 = vst [vmem:[#allocation2 + $0x10] sm:$0xff] %v74
  %148 = vst [vmem:[#allocation2 + $0x18] sm:$0xff] %v97
  %149 = vst [vmem:[#allocation3] sm:$0xff] %v117
  %150 = vst [vmem:[#allocation3 + $0x8] sm:$0xff] %v140
  %151 = vst [vmem:[#allocation3 + $0x10] sm:$0xff] %v120
  %152 = vst [vmem:[#allocation3 + $0x18] sm:$0xff] %v143
  %v153 = vld [vmem:[%s2] sm:$0xff]
  %v154 = vld [vmem:[%s2 + $0x8] sm:$0xff]
  %v155 = vld [vmem:[%s2 + $0x10] sm:$0xff]
  %v156 = vld [vmem:[%s2 + $0x18] sm:$0xff]
  %v157 = vld [vmem:[%s2 + $0x20] sm:$0xff]
  %v158 = vld [vmem:[%s2 + $0x28] sm:$0xff]
  %v159 = vld [vmem:[%s2 + $0x30] sm:$0xff]
  %v160 = vld [vmem:[%s2 + $0x38] sm:$0xff]
  %v161 = vld [vmem:[%s2 + $0x40] sm:$0xff]
  %v162 = vld [vmem:[%s2 + $0x48] sm:$0xff]
  %v163 = vld [vmem:[%s2 + $0x50] sm:$0xff]
  %v164 = vld [vmem:[%s2 + $0x58] sm:$0xff]
  %v165 = vld [vmem:[%s2 + $0x60] sm:$0xff]
  %v166 = vld [vmem:[%s2 + $0x68] sm:$0xff]
  %v167 = vld [vmem:[%s2 + $0x70] sm:$0xff]
  %v168 = vld [vmem:[%s2 + $0x78] sm:$0xff]
  %v169 = vld [vmem:[%s3] sm:$0xff]
  %v170 = vld [vmem:[%s3 + $0x8] sm:$0xff]
  %v171 = vld [vmem:[%s3 + $0x10] sm:$0xff]
  %v172 = vld [vmem:[%s3 + $0x18] sm:$0xff]
  %v173 = vld [vmem:[%s3 + $0x20] sm:$0xff]
  %v174 = vld [vmem:[%s3 + $0x28] sm:$0xff]
  %v175 = vld [vmem:[%s3 + $0x30] sm:$0xff]
  %v176 = vld [vmem:[%s3 + $0x38] sm:$0xff]
  %v177 = vld [vmem:[%s3 + $0x40] sm:$0xff]
  %v178 = vld [vmem:[%s3 + $0x48] sm:$0xff]
  %v179 = vld [vmem:[%s3 + $0x50] sm:$0xff]
  %v180 = vld [vmem:[%s3 + $0x58] sm:$0xff]
  %v181 = vld [vmem:[%s3 + $0x60] sm:$0xff]
  %v182 = vld [vmem:[%s3 + $0x68] sm:$0xff]
  %v183 = vld [vmem:[%s3 + $0x70] sm:$0xff]
  %v184 = vld [vmem:[%s3 + $0x78] sm:$0xff]
  %v185 = vld [vmem:[#allocation2] sm:$0x3]
  %v186 = vld [vmem:[#allocation2 + $0x8] sm:$0x3]
  %vm187 = vcmask 523264
  %v189 = vsel %vm187, 0.0, 0
  %191 = vmatpush.msra.mxu0 0.0
  %192 = vmatpush.msra.mxu0 0.0
  %193 = vmatpush.msra.mxu0 0.0
  %194 = vmatpush.msra.mxu0 0.0
  %195 = vmatpush.msra.mxu0 0.0
  %196 = vmatpush.msra.mxu0 0.0
  %197 = vmatpush.msra.mxu0 0.0
  %198 = vmatpush.msra.mxu0 0.0
  %199 = vmatpush.msra.mxu0 %v167
  %200 = vmatpush.msra.mxu0 %v165
  %201 = vmatpush.msra.mxu0 %v163
  %202 = vmatpush.msra.mxu0 %v161
  %203 = vmatpush.msra.mxu0 %v159
  %204 = vmatpush.msra.mxu0 %v157
  %205 = vmatpush.msra.mxu0 %v155
  %206 = vmatpush.msra.mxu0 %v153
  %207 = vmatmul.f32.gmra.mxu0 %v189
  %v208 = vpop.f32.mrf.mxu0
  %v209 = vadd.f32 0.0, %v208
  %210 = vdwg.mxu0
  %211 = vmatpush.msra.mxu0 0.0
  %212 = vmatpush.msra.mxu0 0.0
  %213 = vmatpush.msra.mxu0 0.0
  %214 = vmatpush.msra.mxu0 0.0
  %215 = vmatpush.msra.mxu0 0.0
  %216 = vmatpush.msra.mxu0 0.0
  %217 = vmatpush.msra.mxu0 0.0
  %218 = vmatpush.msra.mxu0 0.0
  %219 = vmatpush.msra.mxu0 %v168
  %220 = vmatpush.msra.mxu0 %v166
  %221 = vmatpush.msra.mxu0 %v164
  %222 = vmatpush.msra.mxu0 %v162
  %223 = vmatpush.msra.mxu0 %v160
  %224 = vmatpush.msra.mxu0 %v158
  %225 = vmatpush.msra.mxu0 %v156
  %226 = vmatpush.msra.mxu0 %v154
  %227 = vmatmul.f32.gmra.mxu0 %v189
  %v228 = vpop.f32.mrf.mxu0
  %v229 = vadd.f32 0.0, %v228
  %230 = vdwg.mxu0
  %v231 = vadd.f32 %v185, %v209
  %v232 = vadd.f32 %v186, %v229
  %v233 = vxor.u32 %v231, 2147483648
  %v234 = vmul.f32 %v233, 1.442695
  %v235 = vpow.pop %v234
  %v236 = vadd.f32 %v235, 1.0
  %v237 = vrcp.pop %v236
  %v238 = vmul.f32 %v236, %v237
  %v239 = vsub.f32 1.0, %v238
  %v240 = vmul.f32 %v237, %v239
  %v241 = vadd.f32 %v237, %v240
  %vm242 = vweird.f32 %v236
  %vm243 = vweird.f32 %v237
  %vm244 = vmor %vm242, %vm243
  %v245 = vsel %vm244, %v237, %v241
  %v246 = vand.u32 2147483647, %v236
  %vm247 = vcmp.eq.f32.partialorder %v246, 8.507059e+37
  %v248 = vand.u32 %v236, 2147483648
  %v249 = vor.u32 1.1754944e-38, %v248
  %v250 = vsel %vm247, %v249, %v245
  %v251 = vmul.f32 1.0, %v250
  %v252 = vtanh.pop %v232
  %v253 = vxor.u32 %v232, 2147483648
  %v254 = vmul.f32 %v253, 1.442695
  %v255 = vpow.pop %v254
  %v256 = vadd.f32 %v255, 1.0
  %v257 = vrcp.pop %v256
  %v258 = vmul.f32 %v256, %v257
  %v259 = vsub.f32 1.0, %v258
  %v260 = vmul.f32 %v257, %v259
  %v261 = vadd.f32 %v257, %v260
  %vm262 = vweird.f32 %v256
  %vm263 = vweird.f32 %v257
  %vm264 = vmor %vm262, %vm263
  %v265 = vsel %vm264, %v257, %v261
  %v266 = vand.u32 2147483647, %v256
  %vm267 = vcmp.eq.f32.partialorder %v266, 8.507059e+37
  %v268 = vand.u32 %v256, 2147483648
  %v269 = vor.u32 1.1754944e-38, %v268
  %v270 = vsel %vm267, %v269, %v265
  %v271 = vmul.f32 1.0, %v270
  %v272 = vmul.f32 %v251, 0.0
  %v273 = vmul.f32 %v251, %v252
  %275 = vrot.lane.b32.xlu0 %v273, 64
  %v276 = vpop.permute.xlu0 %275
  %v278 = vadd.f32 %v272, %v276
  %v279 = vtanh.pop %v278
  %v280 = vmul.f32 %v271, %v279
  %282 = vrot.lane.b32.xlu0 %v280, 64
  %v283 = vpop.permute.xlu0 %282
  %vm285 = vcmask 517120
  %286 = vst.msk [vmem:[#allocation4] sm:$0x3] %vm285, %v283
  %v287 = vld [vmem:[#allocation3 + $0x10] sm:$0xc0]
  %v288 = vld [vmem:[#allocation3 + $0x18] sm:$0xc0]
  %289 = vmatpush.msra.mxu0 0.0
  %290 = vmatpush.msra.mxu0 0.0
  %291 = vmatpush.msra.mxu0 0.0
  %292 = vmatpush.msra.mxu0 0.0
  %293 = vmatpush.msra.mxu0 0.0
  %294 = vmatpush.msra.mxu0 0.0
  %295 = vmatpush.msra.mxu0 0.0
  %296 = vmatpush.msra.mxu0 0.0
  %297 = vmatpush.msra.mxu0 %v183
  %298 = vmatpush.msra.mxu0 %v181
  %299 = vmatpush.msra.mxu0 %v179
  %300 = vmatpush.msra.mxu0 %v177
  %301 = vmatpush.msra.mxu0 %v175
  %302 = vmatpush.msra.mxu0 %v173
  %303 = vmatpush.msra.mxu0 %v171
  %304 = vmatpush.msra.mxu0 %v169
  %305 = vmatmul.f32.gmra.mxu0 %v189
  %v306 = vpop.f32.mrf.mxu0
  %v307 = vadd.f32 0.0, %v306
  %308 = vdwg.mxu0
  %309 = vmatpush.msra.mxu0 0.0
  %310 = vmatpush.msra.mxu0 0.0
  %311 = vmatpush.msra.mxu0 0.0
  %312 = vmatpush.msra.mxu0 0.0
  %313 = vmatpush.msra.mxu0 0.0
  %314 = vmatpush.msra.mxu0 0.0
  %315 = vmatpush.msra.mxu0 0.0
  %316 = vmatpush.msra.mxu0 0.0
  %317 = vmatpush.msra.mxu0 %v184
  %318 = vmatpush.msra.mxu0 %v182
  %319 = vmatpush.msra.mxu0 %v180
  %320 = vmatpush.msra.mxu0 %v178
  %321 = vmatpush.msra.mxu0 %v176
  %322 = vmatpush.msra.mxu0 %v174
  %323 = vmatpush.msra.mxu0 %v172
  %324 = vmatpush.msra.mxu0 %v170
  %325 = vmatmul.f32.gmra.mxu0 %v189
  %v326 = vpop.f32.mrf.mxu0
  %v327 = vadd.f32 0.0, %v326
  %328 = vdwg.mxu0
  %v331 = vrot.slane %v307, 2
  %v332 = vrot.slane %v327, 2
  %v335 = vadd.f32 %v287, %v331
  %v336 = vadd.f32 %v288, %v332
  %v337 = vxor.u32 %v335, 2147483648
  %v338 = vmul.f32 %v337, 1.442695
  %v339 = vpow.pop %v338
  %v340 = vadd.f32 %v339, 1.0
  %v341 = vrcp.pop %v340
  %v342 = vmul.f32 %v340, %v341
  %v343 = vsub.f32 1.0, %v342
  %v344 = vmul.f32 %v341, %v343
  %v345 = vadd.f32 %v341, %v344
  %vm346 = vweird.f32 %v340
  %vm347 = vweird.f32 %v341
  %vm348 = vmor %vm346, %vm347
  %v349 = vsel %vm348, %v341, %v345
  %v350 = vand.u32 2147483647, %v340
  %vm351 = vcmp.eq.f32.partialorder %v350, 8.507059e+37
  %v352 = vand.u32 %v340, 2147483648
  %v353 = vor.u32 1.1754944e-38, %v352
  %v354 = vsel %vm351, %v353, %v349
  %v355 = vmul.f32 1.0, %v354
  %v356 = vtanh.pop %v336
  %v357 = vxor.u32 %v336, 2147483648
  %v358 = vmul.f32 %v357, 1.442695
  %v359 = vpow.pop %v358
  %v360 = vadd.f32 %v359, 1.0
  %v361 = vrcp.pop %v360
  %v362 = vmul.f32 %v360, %v361
  %v363 = vsub.f32 1.0, %v362
  %v364 = vmul.f32 %v361, %v363
  %v365 = vadd.f32 %v361, %v364
  %vm366 = vweird.f32 %v360
  %vm367 = vweird.f32 %v361
  %vm368 = vmor %vm366, %vm367
  %v369 = vsel %vm368, %v361, %v365
  %v370 = vand.u32 2147483647, %v360
  %vm371 = vcmp.eq.f32.partialorder %v370, 8.507059e+37
  %v372 = vand.u32 %v360, 2147483648
  %v373 = vor.u32 1.1754944e-38, %v372
  %v374 = vsel %vm371, %v373, %v369
  %v375 = vmul.f32 1.0, %v374
  %v376 = vmul.f32 %v355, 0.0
  %v377 = vmul.f32 %v355, %v356
  %379 = vrot.lane.b32.xlu0 %v377, 64
  %v380 = vpop.permute.xlu0 %379
  %v382 = vadd.f32 %v376, %v380
  %v383 = vtanh.pop %v382
  %v384 = vmul.f32 %v375, %v383
  %386 = vrot.lane.b32.xlu0 %v384, 64
  %v387 = vpop.permute.xlu0 %386
  %vm389 = vcmask 523270
  %390 = vst.msk [vmem:[#allocation5 + $0x8] sm:$0xc0] %vm389, %v387
  %v391 = vld [vmem:[#allocation2] sm:$0xc]
  %v392 = vld [vmem:[#allocation2 + $0x8] sm:$0xc]
  %v393 = vsel %vm187, %v283, 0
  %395 = vmatpush.msra.mxu0 0.0
  %396 = vmatpush.msra.mxu0 0.0
  %397 = vmatpush.msra.mxu0 0.0
  %398 = vmatpush.msra.mxu0 0.0
  %399 = vmatpush.msra.mxu0 0.0
  %400 = vmatpush.msra.mxu0 0.0
  %401 = vmatpush.msra.mxu0 0.0
  %402 = vmatpush.msra.mxu0 0.0
  %403 = vmatpush.msra.mxu0 %v167
  %404 = vmatpush.msra.mxu0 %v165
  %405 = vmatpush.msra.mxu0 %v163
  %406 = vmatpush.msra.mxu0 %v161
  %407 = vmatpush.msra.mxu0 %v159
  %408 = vmatpush.msra.mxu0 %v157
  %409 = vmatpush.msra.mxu0 %v155
  %410 = vmatpush.msra.mxu0 %v153
  %411 = vmatmul.f32.gmra.mxu0 %v393
  %v412 = vpop.f32.mrf.mxu0
  %v413 = vadd.f32 0.0, %v412
  %414 = vdwg.mxu0
  %415 = vmatpush.msra.mxu0 0.0
  %416 = vmatpush.msra.mxu0 0.0
  %417 = vmatpush.msra.mxu0 0.0
  %418 = vmatpush.msra.mxu0 0.0
  %419 = vmatpush.msra.mxu0 0.0
  %420 = vmatpush.msra.mxu0 0.0
  %421 = vmatpush.msra.mxu0 0.0
  %422 = vmatpush.msra.mxu0 0.0
  %423 = vmatpush.msra.mxu0 %v168
  %424 = vmatpush.msra.mxu0 %v166
  %425 = vmatpush.msra.mxu0 %v164
  %426 = vmatpush.msra.mxu0 %v162
  %427 = vmatpush.msra.mxu0 %v160
  %428 = vmatpush.msra.mxu0 %v158
  %429 = vmatpush.msra.mxu0 %v156
  %430 = vmatpush.msra.mxu0 %v154
  %431 = vmatmul.f32.gmra.mxu0 %v393
  %v432 = vpop.f32.mrf.mxu0
  %v433 = vadd.f32 0.0, %v432
  %434 = vdwg.mxu0
  %v437 = vrot.slane %v413, 6
  %v438 = vrot.slane %v433, 6
  %v441 = vadd.f32 %v391, %v437
  %v442 = vadd.f32 %v392, %v438
  %v443 = vxor.u32 %v441, 2147483648
  %v444 = vmul.f32 %v443, 1.442695
  %v445 = vpow.pop %v444
  %v446 = vadd.f32 %v445, 1.0
  %v447 = vrcp.pop %v446
  %v448 = vmul.f32 %v446, %v447
  %v449 = vsub.f32 1.0, %v448
  %v450 = vmul.f32 %v447, %v449
  %v451 = vadd.f32 %v447, %v450
  %vm452 = vweird.f32 %v446
  %vm453 = vweird.f32 %v447
  %vm454 = vmor %vm452, %vm453
  %v455 = vsel %vm454, %v447, %v451
  %v456 = vand.u32 2147483647, %v446
  %vm457 = vcmp.eq.f32.partialorder %v456, 8.507059e+37
  %v458 = vand.u32 %v446, 2147483648
  %v459 = vor.u32 1.1754944e-38, %v458
  %v460 = vsel %vm457, %v459, %v455
  %v461 = vmul.f32 1.0, %v460
  %v462 = vtanh.pop %v442
  %v463 = vxor.u32 %v442, 2147483648
  %v464 = vmul.f32 %v463, 1.442695
  %v465 = vpow.pop %v464
  %v466 = vadd.f32 %v465, 1.0
  %v467 = vrcp.pop %v466
  %v468 = vmul.f32 %v466, %v467
  %v469 = vsub.f32 1.0, %v468
  %v470 = vmul.f32 %v467, %v469
  %v471 = vadd.f32 %v467, %v470
  %vm472 = vweird.f32 %v466
  %vm473 = vweird.f32 %v467
  %vm474 = vmor %vm472, %vm473
  %v475 = vsel %vm474, %v467, %v471
  %v476 = vand.u32 2147483647, %v466
  %vm477 = vcmp.eq.f32.partialorder %v476, 8.507059e+37
  %v478 = vand.u32 %v466, 2147483648
  %v479 = vor.u32 1.1754944e-38, %v478
  %v480 = vsel %vm477, %v479, %v475
  %v481 = vmul.f32 1.0, %v480
  %v483 = vrot.slane %v278, 6
  %v485 = vmul.f32 %v461, %v483
  %v486 = vmul.f32 %v461, %v462
  %488 = vrot.lane.b32.xlu0 %v486, 64
  %v489 = vpop.permute.xlu0 %488
  %v491 = vadd.f32 %v485, %v489
  %v492 = vtanh.pop %v491
  %v493 = vmul.f32 %v481, %v492
  %495 = vrot.lane.b32.xlu0 %v493, 64
  %v496 = vpop.permute.xlu0 %495
  %vm498 = vcmask 519170
  %499 = vst.msk [vmem:[#allocation4] sm:$0xc] %vm498, %v496
  %v500 = vld [vmem:[#allocation3 + $0x10] sm:$0x30]
  %v501 = vld [vmem:[#allocation3 + $0x18] sm:$0x30]
  %v502 = vrot.slane %v384, 6
  %503 = vrot.lane.b32.xlu0 %v502, 64
  %v504 = vpop.permute.xlu0 %503
  %v505 = vsel %vm187, %v504, 0
  %507 = vmatpush.msra.mxu0 0.0
  %508 = vmatpush.msra.mxu0 0.0
  %509 = vmatpush.msra.mxu0 0.0
  %510 = vmatpush.msra.mxu0 0.0
  %511 = vmatpush.msra.mxu0 0.0
  %512 = vmatpush.msra.mxu0 0.0
  %513 = vmatpush.msra.mxu0 0.0
  %514 = vmatpush.msra.mxu0 0.0
  %515 = vmatpush.msra.mxu0 %v183
  %516 = vmatpush.msra.mxu0 %v181
  %517 = vmatpush.msra.mxu0 %v179
  %518 = vmatpush.msra.mxu0 %v177
  %519 = vmatpush.msra.mxu0 %v175
  %520 = vmatpush.msra.mxu0 %v173
  %521 = vmatpush.msra.mxu0 %v171
  %522 = vmatpush.msra.mxu0 %v169
  %523 = vmatmul.f32.gmra.mxu0 %v505
  %v524 = vpop.f32.mrf.mxu0
  %v525 = vadd.f32 0.0, %v524
  %526 = vdwg.mxu0
  %527 = vmatpush.msra.mxu0 0.0
  %528 = vmatpush.msra.mxu0 0.0
  %529 = vmatpush.msra.mxu0 0.0
  %530 = vmatpush.msra.mxu0 0.0
  %531 = vmatpush.msra.mxu0 0.0
  %532 = vmatpush.msra.mxu0 0.0
  %533 = vmatpush.msra.mxu0 0.0
  %534 = vmatpush.msra.mxu0 0.0
  %535 = vmatpush.msra.mxu0 %v184
  %536 = vmatpush.msra.mxu0 %v182
  %537 = vmatpush.msra.mxu0 %v180
  %538 = vmatpush.msra.mxu0 %v178
  %539 = vmatpush.msra.mxu0 %v176
  %540 = vmatpush.msra.mxu0 %v174
  %541 = vmatpush.msra.mxu0 %v172
  %542 = vmatpush.msra.mxu0 %v170
  %543 = vmatmul.f32.gmra.mxu0 %v505
  %v544 = vpop.f32.mrf.mxu0
  %v545 = vadd.f32 0.0, %v544
  %546 = vdwg.mxu0
  %v549 = vrot.slane %v525, 4
  %v550 = vrot.slane %v545, 4
  %v553 = vadd.f32 %v500, %v549
  %v554 = vadd.f32 %v501, %v550
  %v555 = vxor.u32 %v553, 2147483648
  %v556 = vmul.f32 %v555, 1.442695
  %v557 = vpow.pop %v556
  %v558 = vadd.f32 %v557, 1.0
  %v559 = vrcp.pop %v558
  %v560 = vmul.f32 %v558, %v559
  %v561 = vsub.f32 1.0, %v560
  %v562 = vmul.f32 %v559, %v561
  %v563 = vadd.f32 %v559, %v562
  %vm564 = vweird.f32 %v558
  %vm565 = vweird.f32 %v559
  %vm566 = vmor %vm564, %vm565
  %v567 = vsel %vm566, %v559, %v563
  %v568 = vand.u32 2147483647, %v558
  %vm569 = vcmp.eq.f32.partialorder %v568, 8.507059e+37
  %v570 = vand.u32 %v558, 2147483648
  %v571 = vor.u32 1.1754944e-38, %v570
  %v572 = vsel %vm569, %v571, %v567
  %v573 = vmul.f32 1.0, %v572
  %v574 = vtanh.pop %v554
  %v575 = vxor.u32 %v554, 2147483648
  %v576 = vmul.f32 %v575, 1.442695
  %v577 = vpow.pop %v576
  %v578 = vadd.f32 %v577, 1.0
  %v579 = vrcp.pop %v578
  %v580 = vmul.f32 %v578, %v579
  %v581 = vsub.f32 1.0, %v580
  %v582 = vmul.f32 %v579, %v581
  %v583 = vadd.f32 %v579, %v582
  %vm584 = vweird.f32 %v578
  %vm585 = vweird.f32 %v579
  %vm586 = vmor %vm584, %vm585
  %v587 = vsel %vm586, %v579, %v583
  %v588 = vand.u32 2147483647, %v578
  %vm589 = vcmp.eq.f32.partialorder %v588, 8.507059e+37
  %v590 = vand.u32 %v578, 2147483648
  %v591 = vor.u32 1.1754944e-38, %v590
  %v592 = vsel %vm589, %v591, %v587
  %v593 = vmul.f32 1.0, %v592
  %v595 = vrot.slane %v382, 2
  %v597 = vmul.f32 %v573, %v595
  %v598 = vmul.f32 %v573, %v574
  %600 = vrot.lane.b32.xlu0 %v598, 64
  %v601 = vpop.permute.xlu0 %600
  %v603 = vadd.f32 %v597, %v601
  %v604 = vtanh.pop %v603
  %v605 = vmul.f32 %v593, %v604
  %607 = vrot.lane.b32.xlu0 %v605, 64
  %v608 = vpop.permute.xlu0 %607
  %vm610 = vcmask 521220
  %611 = vst.msk [vmem:[#allocation5 + $0x8] sm:$0x30] %vm610, %v608
  %v612 = vld [vmem:[#allocation2] sm:$0x30]
  %v613 = vld [vmem:[#allocation2 + $0x8] sm:$0x30]
  %v614 = vrot.slane %v493, 2
  %615 = vrot.lane.b32.xlu0 %v614, 64
  %v616 = vpop.permute.xlu0 %615
  %v617 = vsel %vm187, %v616, 0
  %619 = vmatpush.msra.mxu0 0.0
  %620 = vmatpush.msra.mxu0 0.0
  %621 = vmatpush.msra.mxu0 0.0
  %622 = vmatpush.msra.mxu0 0.0
  %623 = vmatpush.msra.mxu0 0.0
  %624 = vmatpush.msra.mxu0 0.0
  %625 = vmatpush.msra.mxu0 0.0
  %626 = vmatpush.msra.mxu0 0.0
  %627 = vmatpush.msra.mxu0 %v167
  %628 = vmatpush.msra.mxu0 %v165
  %629 = vmatpush.msra.mxu0 %v163
  %630 = vmatpush.msra.mxu0 %v161
  %631 = vmatpush.msra.mxu0 %v159
  %632 = vmatpush.msra.mxu0 %v157
  %633 = vmatpush.msra.mxu0 %v155
  %634 = vmatpush.msra.mxu0 %v153
  %635 = vmatmul.f32.gmra.mxu0 %v617
  %v636 = vpop.f32.mrf.mxu0
  %v637 = vadd.f32 0.0, %v636
  %638 = vdwg.mxu0
  %639 = vmatpush.msra.mxu0 0.0
  %640 = vmatpush.msra.mxu0 0.0
  %641 = vmatpush.msra.mxu0 0.0
  %642 = vmatpush.msra.mxu0 0.0
  %643 = vmatpush.msra.mxu0 0.0
  %644 = vmatpush.msra.mxu0 0.0
  %645 = vmatpush.msra.mxu0 0.0
  %646 = vmatpush.msra.mxu0 0.0
  %647 = vmatpush.msra.mxu0 %v168
  %648 = vmatpush.msra.mxu0 %v166
  %649 = vmatpush.msra.mxu0 %v164
  %650 = vmatpush.msra.mxu0 %v162
  %651 = vmatpush.msra.mxu0 %v160
  %652 = vmatpush.msra.mxu0 %v158
  %653 = vmatpush.msra.mxu0 %v156
  %654 = vmatpush.msra.mxu0 %v154
  %655 = vmatmul.f32.gmra.mxu0 %v617
  %v656 = vpop.f32.mrf.mxu0
  %v657 = vadd.f32 0.0, %v656
  %658 = vdwg.mxu0
  %v661 = vrot.slane %v637, 4
  %v662 = vrot.slane %v657, 4
  %v665 = vadd.f32 %v612, %v661
  %v666 = vadd.f32 %v613, %v662
  %v667 = vxor.u32 %v665, 2147483648
  %v668 = vmul.f32 %v667, 1.442695
  %v669 = vpow.pop %v668
  %v670 = vadd.f32 %v669, 1.0
  %v671 = vrcp.pop %v670
  %v672 = vmul.f32 %v670, %v671
  %v673 = vsub.f32 1.0, %v672
  %v674 = vmul.f32 %v671, %v673
  %v675 = vadd.f32 %v671, %v674
  %vm676 = vweird.f32 %v670
  %vm677 = vweird.f32 %v671
  %vm678 = vmor %vm676, %vm677
  %v679 = vsel %vm678, %v671, %v675
  %v680 = vand.u32 2147483647, %v670
  %vm681 = vcmp.eq.f32.partialorder %v680, 8.507059e+37
  %v682 = vand.u32 %v670, 2147483648
  %v683 = vor.u32 1.1754944e-38, %v682
  %v684 = vsel %vm681, %v683, %v679
  %v685 = vmul.f32 1.0, %v684
  %v686 = vtanh.pop %v666
  %v687 = vxor.u32 %v666, 2147483648
  %v688 = vmul.f32 %v687, 1.442695
  %v689 = vpow.pop %v688
  %v690 = vadd.f32 %v689, 1.0
  %v691 = vrcp.pop %v690
  %v692 = vmul.f32 %v690, %v691
  %v693 = vsub.f32 1.0, %v692
  %v694 = vmul.f32 %v691, %v693
  %v695 = vadd.f32 %v691, %v694
  %vm696 = vweird.f32 %v690
  %vm697 = vweird.f32 %v691
  %vm698 = vmor %vm696, %vm697
  %v699 = vsel %vm698, %v691, %v695
  %v700 = vand.u32 2147483647, %v690
  %vm701 = vcmp.eq.f32.partialorder %v700, 8.507059e+37
  %v702 = vand.u32 %v690, 2147483648
  %v703 = vor.u32 1.1754944e-38, %v702
  %v704 = vsel %vm701, %v703, %v699
  %v705 = vmul.f32 1.0, %v704
  %v707 = vrot.slane %v491, 6
  %v709 = vmul.f32 %v685, %v707
  %v710 = vmul.f32 %v685, %v686
  %712 = vrot.lane.b32.xlu0 %v710, 64
  %v713 = vpop.permute.xlu0 %712
  %v715 = vadd.f32 %v709, %v713
  %v716 = vtanh.pop %v715
  %v717 = vmul.f32 %v705, %v716
  %719 = vrot.lane.b32.xlu0 %v717, 64
  %v720 = vpop.permute.xlu0 %719
  %722 = vst.msk [vmem:[#allocation4] sm:$0x30] %vm610, %v720
  %v723 = vld [vmem:[#allocation3 + $0x10] sm:$0xc]
  %v724 = vld [vmem:[#allocation3 + $0x18] sm:$0xc]
  %v725 = vrot.slane %v605, 4
  %726 = vrot.lane.b32.xlu0 %v725, 64
  %v727 = vpop.permute.xlu0 %726
  %v728 = vsel %vm187, %v727, 0
  %730 = vmatpush.msra.mxu0 0.0
  %731 = vmatpush.msra.mxu0 0.0
  %732 = vmatpush.msra.mxu0 0.0
  %733 = vmatpush.msra.mxu0 0.0
  %734 = vmatpush.msra.mxu0 0.0
  %735 = vmatpush.msra.mxu0 0.0
  %736 = vmatpush.msra.mxu0 0.0
  %737 = vmatpush.msra.mxu0 0.0
  %738 = vmatpush.msra.mxu0 %v183
  %739 = vmatpush.msra.mxu0 %v181
  %740 = vmatpush.msra.mxu0 %v179
  %741 = vmatpush.msra.mxu0 %v177
  %742 = vmatpush.msra.mxu0 %v175
  %743 = vmatpush.msra.mxu0 %v173
  %744 = vmatpush.msra.mxu0 %v171
  %745 = vmatpush.msra.mxu0 %v169
  %746 = vmatmul.f32.gmra.mxu0 %v728
  %v747 = vpop.f32.mrf.mxu0
  %v748 = vadd.f32 0.0, %v747
  %749 = vdwg.mxu0
  %750 = vmatpush.msra.mxu0 0.0
  %751 = vmatpush.msra.mxu0 0.0
  %752 = vmatpush.msra.mxu0 0.0
  %753 = vmatpush.msra.mxu0 0.0
  %754 = vmatpush.msra.mxu0 0.0
  %755 = vmatpush.msra.mxu0 0.0
  %756 = vmatpush.msra.mxu0 0.0
  %757 = vmatpush.msra.mxu0 0.0
  %758 = vmatpush.msra.mxu0 %v184
  %759 = vmatpush.msra.mxu0 %v182
  %760 = vmatpush.msra.mxu0 %v180
  %761 = vmatpush.msra.mxu0 %v178
  %762 = vmatpush.msra.mxu0 %v176
  %763 = vmatpush.msra.mxu0 %v174
  %764 = vmatpush.msra.mxu0 %v172
  %765 = vmatpush.msra.mxu0 %v170
  %766 = vmatmul.f32.gmra.mxu0 %v728
  %v767 = vpop.f32.mrf.mxu0
  %v768 = vadd.f32 0.0, %v767
  %769 = vdwg.mxu0
  %v772 = vrot.slane %v748, 6
  %v773 = vrot.slane %v768, 6
  %v776 = vadd.f32 %v723, %v772
  %v777 = vadd.f32 %v724, %v773
  %v778 = vxor.u32 %v776, 2147483648
  %v779 = vmul.f32 %v778, 1.442695
  %v780 = vpow.pop %v779
  %v781 = vadd.f32 %v780, 1.0
  %v782 = vrcp.pop %v781
  %v783 = vmul.f32 %v781, %v782
  %v784 = vsub.f32 1.0, %v783
  %v785 = vmul.f32 %v782, %v784
  %v786 = vadd.f32 %v782, %v785
  %vm787 = vweird.f32 %v781
  %vm788 = vweird.f32 %v782
  %vm789 = vmor %vm787, %vm788
  %v790 = vsel %vm789, %v782, %v786
  %v791 = vand.u32 2147483647, %v781
  %vm792 = vcmp.eq.f32.partialorder %v791, 8.507059e+37
  %v793 = vand.u32 %v781, 2147483648
  %v794 = vor.u32 1.1754944e-38, %v793
  %v795 = vsel %vm792, %v794, %v790
  %v796 = vmul.f32 1.0, %v795
  %v797 = vtanh.pop %v777
  %v798 = vxor.u32 %v777, 2147483648
  %v799 = vmul.f32 %v798, 1.442695
  %v800 = vpow.pop %v799
  %v801 = vadd.f32 %v800, 1.0
  %v802 = vrcp.pop %v801
  %v803 = vmul.f32 %v801, %v802
  %v804 = vsub.f32 1.0, %v803
  %v805 = vmul.f32 %v802, %v804
  %v806 = vadd.f32 %v802, %v805
  %vm807 = vweird.f32 %v801
  %vm808 = vweird.f32 %v802
  %vm809 = vmor %vm807, %vm808
  %v810 = vsel %vm809, %v802, %v806
  %v811 = vand.u32 2147483647, %v801
  %vm812 = vcmp.eq.f32.partialorder %v811, 8.507059e+37
  %v813 = vand.u32 %v801, 2147483648
  %v814 = vor.u32 1.1754944e-38, %v813
  %v815 = vsel %vm812, %v814, %v810
  %v816 = vmul.f32 1.0, %v815
  %v818 = vrot.slane %v603, 2
  %v820 = vmul.f32 %v796, %v818
  %v821 = vmul.f32 %v796, %v797
  %823 = vrot.lane.b32.xlu0 %v821, 64
  %v824 = vpop.permute.xlu0 %823
  %v826 = vadd.f32 %v820, %v824
  %v827 = vtanh.pop %v826
  %v828 = vmul.f32 %v816, %v827
  %830 = vrot.lane.b32.xlu0 %v828, 64
  %v831 = vpop.permute.xlu0 %830
  %833 = vst.msk [vmem:[#allocation5 + $0x8] sm:$0xc] %vm498, %v831
  %v834 = vld [vmem:[#allocation2] sm:$0xc0]
  %v835 = vld [vmem:[#allocation2 + $0x8] sm:$0xc0]
  %v836 = vrot.slane %v717, 4
  %837 = vrot.lane.b32.xlu0 %v836, 64
  %v838 = vpop.permute.xlu0 %837
  %v839 = vsel %vm187, %v838, 0
  %841 = vmatpush.msra.mxu0 0.0
  %842 = vmatpush.msra.mxu0 0.0
  %843 = vmatpush.msra.mxu0 0.0
  %844 = vmatpush.msra.mxu0 0.0
  %845 = vmatpush.msra.mxu0 0.0
  %846 = vmatpush.msra.mxu0 0.0
  %847 = vmatpush.msra.mxu0 0.0
  %848 = vmatpush.msra.mxu0 0.0
  %849 = vmatpush.msra.mxu0 %v167
  %850 = vmatpush.msra.mxu0 %v165
  %851 = vmatpush.msra.mxu0 %v163
  %852 = vmatpush.msra.mxu0 %v161
  %853 = vmatpush.msra.mxu0 %v159
  %854 = vmatpush.msra.mxu0 %v157
  %855 = vmatpush.msra.mxu0 %v155
  %856 = vmatpush.msra.mxu0 %v153
  %857 = vmatmul.f32.gmra.mxu0 %v839
  %v858 = vpop.f32.mrf.mxu0
  %v859 = vadd.f32 0.0, %v858
  %860 = vdwg.mxu0
  %861 = vmatpush.msra.mxu0 0.0
  %862 = vmatpush.msra.mxu0 0.0
  %863 = vmatpush.msra.mxu0 0.0
  %864 = vmatpush.msra.mxu0 0.0
  %865 = vmatpush.msra.mxu0 0.0
  %866 = vmatpush.msra.mxu0 0.0
  %867 = vmatpush.msra.mxu0 0.0
  %868 = vmatpush.msra.mxu0 0.0
  %869 = vmatpush.msra.mxu0 %v168
  %870 = vmatpush.msra.mxu0 %v166
  %871 = vmatpush.msra.mxu0 %v164
  %872 = vmatpush.msra.mxu0 %v162
  %873 = vmatpush.msra.mxu0 %v160
  %874 = vmatpush.msra.mxu0 %v158
  %875 = vmatpush.msra.mxu0 %v156
  %876 = vmatpush.msra.mxu0 %v154
  %877 = vmatmul.f32.gmra.mxu0 %v839
  %v878 = vpop.f32.mrf.mxu0
  %v879 = vadd.f32 0.0, %v878
  %880 = vdwg.mxu0
  %v883 = vrot.slane %v859, 2
  %v884 = vrot.slane %v879, 2
  %v887 = vadd.f32 %v834, %v883
  %v888 = vadd.f32 %v835, %v884
  %v889 = vxor.u32 %v887, 2147483648
  %v890 = vmul.f32 %v889, 1.442695
  %v891 = vpow.pop %v890
  %v892 = vadd.f32 %v891, 1.0
  %v893 = vrcp.pop %v892
  %v894 = vmul.f32 %v892, %v893
  %v895 = vsub.f32 1.0, %v894
  %v896 = vmul.f32 %v893, %v895
  %v897 = vadd.f32 %v893, %v896
  %vm898 = vweird.f32 %v892
  %vm899 = vweird.f32 %v893
  %vm900 = vmor %vm898, %vm899
  %v901 = vsel %vm900, %v893, %v897
  %v902 = vand.u32 2147483647, %v892
  %vm903 = vcmp.eq.f32.partialorder %v902, 8.507059e+37
  %v904 = vand.u32 %v892, 2147483648
  %v905 = vor.u32 1.1754944e-38, %v904
  %v906 = vsel %vm903, %v905, %v901
  %v907 = vmul.f32 1.0, %v906
  %v908 = vtanh.pop %v888
  %v909 = vxor.u32 %v888, 2147483648
  %v910 = vmul.f32 %v909, 1.442695
  %v911 = vpow.pop %v910
  %v912 = vadd.f32 %v911, 1.0
  %v913 = vrcp.pop %v912
  %v914 = vmul.f32 %v912, %v913
  %v915 = vsub.f32 1.0, %v914
  %v916 = vmul.f32 %v913, %v915
  %v917 = vadd.f32 %v913, %v916
  %vm918 = vweird.f32 %v912
  %vm919 = vweird.f32 %v913
  %vm920 = vmor %vm918, %vm919
  %v921 = vsel %vm920, %v913, %v917
  %v922 = vand.u32 2147483647, %v912
  %vm923 = vcmp.eq.f32.partialorder %v922, 8.507059e+37
  %v924 = vand.u32 %v912, 2147483648
  %v925 = vor.u32 1.1754944e-38, %v924
  %v926 = vsel %vm923, %v925, %v921
  %v927 = vmul.f32 1.0, %v926
  %v929 = vrot.slane %v715, 6
  %v931 = vmul.f32 %v907, %v929
  %v932 = vmul.f32 %v907, %v908
  %934 = vrot.lane.b32.xlu0 %v932, 64
  %v935 = vpop.permute.xlu0 %934
  %v937 = vadd.f32 %v931, %v935
  %v938 = vtanh.pop %v937
  %v939 = vmul.f32 %v927, %v938
  %941 = vrot.lane.b32.xlu0 %v939, 64
  %v942 = vpop.permute.xlu0 %941
  %944 = vst.msk [vmem:[#allocation4] sm:$0xc0] %vm389, %v942
  %v945 = vld [vmem:[#allocation3 + $0x10] sm:$0x3]
  %v946 = vld [vmem:[#allocation3 + $0x18] sm:$0x3]
  %v947 = vrot.slane %v828, 2
  %948 = vrot.lane.b32.xlu0 %v947, 64
  %v949 = vpop.permute.xlu0 %948
  %v950 = vsel %vm187, %v949, 0
  %952 = vmatpush.msra.mxu0 0.0
  %953 = vmatpush.msra.mxu0 0.0
  %954 = vmatpush.msra.mxu0 0.0
  %955 = vmatpush.msra.mxu0 0.0
  %956 = vmatpush.msra.mxu0 0.0
  %957 = vmatpush.msra.mxu0 0.0
  %958 = vmatpush.msra.mxu0 0.0
  %959 = vmatpush.msra.mxu0 0.0
  %960 = vmatpush.msra.mxu0 %v183
  %961 = vmatpush.msra.mxu0 %v181
  %962 = vmatpush.msra.mxu0 %v179
  %963 = vmatpush.msra.mxu0 %v177
  %964 = vmatpush.msra.mxu0 %v175
  %965 = vmatpush.msra.mxu0 %v173
  %966 = vmatpush.msra.mxu0 %v171
  %967 = vmatpush.msra.mxu0 %v169
  %968 = vmatmul.f32.gmra.mxu0 %v950
  %v969 = vpop.f32.mrf.mxu0
  %v970 = vadd.f32 0.0, %v969
  %971 = vdwg.mxu0
  %972 = vmatpush.msra.mxu0 0.0
  %973 = vmatpush.msra.mxu0 0.0
  %974 = vmatpush.msra.mxu0 0.0
  %975 = vmatpush.msra.mxu0 0.0
  %976 = vmatpush.msra.mxu0 0.0
  %977 = vmatpush.msra.mxu0 0.0
  %978 = vmatpush.msra.mxu0 0.0
  %979 = vmatpush.msra.mxu0 0.0
  %980 = vmatpush.msra.mxu0 %v184
  %981 = vmatpush.msra.mxu0 %v182
  %982 = vmatpush.msra.mxu0 %v180
  %983 = vmatpush.msra.mxu0 %v178
  %984 = vmatpush.msra.mxu0 %v176
  %985 = vmatpush.msra.mxu0 %v174
  %986 = vmatpush.msra.mxu0 %v172
  %987 = vmatpush.msra.mxu0 %v170
  %988 = vmatmul.f32.gmra.mxu0 %v950
  %v989 = vpop.f32.mrf.mxu0
  %v990 = vadd.f32 0.0, %v989
  %991 = vdwg.mxu0
  %v992 = vadd.f32 %v945, %v970
  %v993 = vadd.f32 %v946, %v990
  %v994 = vxor.u32 %v992, 2147483648
  %v995 = vmul.f32 %v994, 1.442695
  %v996 = vpow.pop %v995
  %v997 = vadd.f32 %v996, 1.0
  %v998 = vrcp.pop %v997
  %v999 = vmul.f32 %v997, %v998
  %v1000 = vsub.f32 1.0, %v999
  %v1001 = vmul.f32 %v998, %v1000
  %v1002 = vadd.f32 %v998, %v1001
  %vm1003 = vweird.f32 %v997
  %vm1004 = vweird.f32 %v998
  %vm1005 = vmor %vm1003, %vm1004
  %v1006 = vsel %vm1005, %v998, %v1002
  %v1007 = vand.u32 2147483647, %v997
  %vm1008 = vcmp.eq.f32.partialorder %v1007, 8.507059e+37
  %v1009 = vand.u32 %v997, 2147483648
  %v1010 = vor.u32 1.1754944e-38, %v1009
  %v1011 = vsel %vm1008, %v1010, %v1006
  %v1012 = vmul.f32 1.0, %v1011
  %v1013 = vtanh.pop %v993
  %v1014 = vxor.u32 %v993, 2147483648
  %v1015 = vmul.f32 %v1014, 1.442695
  %v1016 = vpow.pop %v1015
  %v1017 = vadd.f32 %v1016, 1.0
  %v1018 = vrcp.pop %v1017
  %v1019 = vmul.f32 %v1017, %v1018
  %v1020 = vsub.f32 1.0, %v1019
  %v1021 = vmul.f32 %v1018, %v1020
  %v1022 = vadd.f32 %v1018, %v1021
  %vm1023 = vweird.f32 %v1017
  %vm1024 = vweird.f32 %v1018
  %vm1025 = vmor %vm1023, %vm1024
  %v1026 = vsel %vm1025, %v1018, %v1022
  %v1027 = vand.u32 2147483647, %v1017
  %vm1028 = vcmp.eq.f32.partialorder %v1027, 8.507059e+37
  %v1029 = vand.u32 %v1017, 2147483648
  %v1030 = vor.u32 1.1754944e-38, %v1029
  %v1031 = vsel %vm1028, %v1030, %v1026
  %v1032 = vmul.f32 1.0, %v1031
  %v1034 = vrot.slane %v826, 2
  %v1036 = vmul.f32 %v1012, %v1034
  %v1037 = vmul.f32 %v1012, %v1013
  %1039 = vrot.lane.b32.xlu0 %v1037, 64
  %v1040 = vpop.permute.xlu0 %1039
  %v1042 = vadd.f32 %v1036, %v1040
  %v1043 = vtanh.pop %v1042
  %v1044 = vmul.f32 %v1032, %v1043
  %1046 = vrot.lane.b32.xlu0 %v1044, 64
  %v1047 = vpop.permute.xlu0 %1046
  %1049 = vst.msk [vmem:[#allocation5 + $0x8] sm:$0x3] %vm285, %v1047
  %v1050 = vld [vmem:[#allocation2 + $0x10] sm:$0x3]
  %v1051 = vld [vmem:[#allocation2 + $0x18] sm:$0x3]
  %v1052 = vrot.slane %v939, 6
  %1053 = vrot.lane.b32.xlu0 %v1052, 64
  %v1054 = vpop.permute.xlu0 %1053
  %v1055 = vsel %vm187, %v1054, 0
  %1057 = vmatpush.msra.mxu0 0.0
  %1058 = vmatpush.msra.mxu0 0.0
  %1059 = vmatpush.msra.mxu0 0.0
  %1060 = vmatpush.msra.mxu0 0.0
  %1061 = vmatpush.msra.mxu0 0.0
  %1062 = vmatpush.msra.mxu0 0.0
  %1063 = vmatpush.msra.mxu0 0.0
  %1064 = vmatpush.msra.mxu0 0.0
  %1065 = vmatpush.msra.mxu0 %v167
  %1066 = vmatpush.msra.mxu0 %v165
  %1067 = vmatpush.msra.mxu0 %v163
  %1068 = vmatpush.msra.mxu0 %v161
  %1069 = vmatpush.msra.mxu0 %v159
  %1070 = vmatpush.msra.mxu0 %v157
  %1071 = vmatpush.msra.mxu0 %v155
  %1072 = vmatpush.msra.mxu0 %v153
  %1073 = vmatmul.f32.gmra.mxu0 %v1055
  %v1074 = vpop.f32.mrf.mxu0
  %v1075 = vadd.f32 0.0, %v1074
  %1076 = vdwg.mxu0
  %1077 = vmatpush.msra.mxu0 0.0
  %1078 = vmatpush.msra.mxu0 0.0
  %1079 = vmatpush.msra.mxu0 0.0
  %1080 = vmatpush.msra.mxu0 0.0
  %1081 = vmatpush.msra.mxu0 0.0
  %1082 = vmatpush.msra.mxu0 0.0
  %1083 = vmatpush.msra.mxu0 0.0
  %1084 = vmatpush.msra.mxu0 0.0
  %1085 = vmatpush.msra.mxu0 %v168
  %1086 = vmatpush.msra.mxu0 %v166
  %1087 = vmatpush.msra.mxu0 %v164
  %1088 = vmatpush.msra.mxu0 %v162
  %1089 = vmatpush.msra.mxu0 %v160
  %1090 = vmatpush.msra.mxu0 %v158
  %1091 = vmatpush.msra.mxu0 %v156
  %1092 = vmatpush.msra.mxu0 %v154
  %1093 = vmatmul.f32.gmra.mxu0 %v1055
  %v1094 = vpop.f32.mrf.mxu0
  %v1095 = vadd.f32 0.0, %v1094
  %1096 = vdwg.mxu0
  %v1097 = vadd.f32 %v1050, %v1075
  %v1098 = vadd.f32 %v1051, %v1095
  %v1099 = vxor.u32 %v1097, 2147483648
  %v1100 = vmul.f32 %v1099, 1.442695
  %v1101 = vpow.pop %v1100
  %v1102 = vadd.f32 %v1101, 1.0
  %v1103 = vrcp.pop %v1102
  %v1104 = vmul.f32 %v1102, %v1103
  %v1105 = vsub.f32 1.0, %v1104
  %v1106 = vmul.f32 %v1103, %v1105
  %v1107 = vadd.f32 %v1103, %v1106
  %vm1108 = vweird.f32 %v1102
  %vm1109 = vweird.f32 %v1103
  %vm1110 = vmor %vm1108, %vm1109
  %v1111 = vsel %vm1110, %v1103, %v1107
  %v1112 = vand.u32 2147483647, %v1102
  %vm1113 = vcmp.eq.f32.partialorder %v1112, 8.507059e+37
  %v1114 = vand.u32 %v1102, 2147483648
  %v1115 = vor.u32 1.1754944e-38, %v1114
  %v1116 = vsel %vm1113, %v1115, %v1111
  %v1117 = vmul.f32 1.0, %v1116
  %v1118 = vtanh.pop %v1098
  %v1119 = vxor.u32 %v1098, 2147483648
  %v1120 = vmul.f32 %v1119, 1.442695
  %v1121 = vpow.pop %v1120
  %v1122 = vadd.f32 %v1121, 1.0
  %v1123 = vrcp.pop %v1122
  %v1124 = vmul.f32 %v1122, %v1123
  %v1125 = vsub.f32 1.0, %v1124
  %v1126 = vmul.f32 %v1123, %v1125
  %v1127 = vadd.f32 %v1123, %v1126
  %vm1128 = vweird.f32 %v1122
  %vm1129 = vweird.f32 %v1123
  %vm1130 = vmor %vm1128, %vm1129
  %v1131 = vsel %vm1130, %v1123, %v1127
  %v1132 = vand.u32 2147483647, %v1122
  %vm1133 = vcmp.eq.f32.partialorder %v1132, 8.507059e+37
  %v1134 = vand.u32 %v1122, 2147483648
  %v1135 = vor.u32 1.1754944e-38, %v1134
  %v1136 = vsel %vm1133, %v1135, %v1131
  %v1137 = vmul.f32 1.0, %v1136
  %v1139 = vrot.slane %v937, 6
  %v1141 = vmul.f32 %v1117, %v1139
  %v1142 = vmul.f32 %v1117, %v1118
  %1144 = vrot.lane.b32.xlu0 %v1142, 64
  %v1145 = vpop.permute.xlu0 %1144
  %v1147 = vadd.f32 %v1141, %v1145
  %v1148 = vtanh.pop %v1147
  %v1149 = vmul.f32 %v1137, %v1148
  %1151 = vrot.lane.b32.xlu0 %v1149, 64
  %v1152 = vpop.permute.xlu0 %1151
  %1154 = vst.msk [vmem:[#allocation4 + $0x8] sm:$0x3] %vm285, %v1152
  %v1155 = vld [vmem:[#allocation3] sm:$0xc0]
  %v1156 = vld [vmem:[#allocation3 + $0x8] sm:$0xc0]
  %v1157 = vsel %vm187, %v1047, 0
  %1159 = vmatpush.msra.mxu0 0.0
  %1160 = vmatpush.msra.mxu0 0.0
  %1161 = vmatpush.msra.mxu0 0.0
  %1162 = vmatpush.msra.mxu0 0.0
  %1163 = vmatpush.msra.mxu0 0.0
  %1164 = vmatpush.msra.mxu0 0.0
  %1165 = vmatpush.msra.mxu0 0.0
  %1166 = vmatpush.msra.mxu0 0.0
  %1167 = vmatpush.msra.mxu0 %v183
  %1168 = vmatpush.msra.mxu0 %v181
  %1169 = vmatpush.msra.mxu0 %v179
  %1170 = vmatpush.msra.mxu0 %v177
  %1171 = vmatpush.msra.mxu0 %v175
  %1172 = vmatpush.msra.mxu0 %v173
  %1173 = vmatpush.msra.mxu0 %v171
  %1174 = vmatpush.msra.mxu0 %v169
  %1175 = vmatmul.f32.gmra.mxu0 %v1157
  %v1176 = vpop.f32.mrf.mxu0
  %v1177 = vadd.f32 0.0, %v1176
  %1178 = vdwg.mxu0
  %1179 = vmatpush.msra.mxu0 0.0
  %1180 = vmatpush.msra.mxu0 0.0
  %1181 = vmatpush.msra.mxu0 0.0
  %1182 = vmatpush.msra.mxu0 0.0
  %1183 = vmatpush.msra.mxu0 0.0
  %1184 = vmatpush.msra.mxu0 0.0
  %1185 = vmatpush.msra.mxu0 0.0
  %1186 = vmatpush.msra.mxu0 0.0
  %1187 = vmatpush.msra.mxu0 %v184
  %1188 = vmatpush.msra.mxu0 %v182
  %1189 = vmatpush.msra.mxu0 %v180
  %1190 = vmatpush.msra.mxu0 %v178
  %1191 = vmatpush.msra.mxu0 %v176
  %1192 = vmatpush.msra.mxu0 %v174
  %1193 = vmatpush.msra.mxu0 %v172
  %1194 = vmatpush.msra.mxu0 %v170
  %1195 = vmatmul.f32.gmra.mxu0 %v1157
  %v1196 = vpop.f32.mrf.mxu0
  %v1197 = vadd.f32 0.0, %v1196
  %1198 = vdwg.mxu0
  %v1201 = vrot.slane %v1177, 2
  %v1202 = vrot.slane %v1197, 2
  %v1205 = vadd.f32 %v1155, %v1201
  %v1206 = vadd.f32 %v1156, %v1202
  %v1207 = vxor.u32 %v1205, 2147483648
  %v1208 = vmul.f32 %v1207, 1.442695
  %v1209 = vpow.pop %v1208
  %v1210 = vadd.f32 %v1209, 1.0
  %v1211 = vrcp.pop %v1210
  %v1212 = vmul.f32 %v1210, %v1211
  %v1213 = vsub.f32 1.0, %v1212
  %v1214 = vmul.f32 %v1211, %v1213
  %v1215 = vadd.f32 %v1211, %v1214
  %vm1216 = vweird.f32 %v1210
  %vm1217 = vweird.f32 %v1211
  %vm1218 = vmor %vm1216, %vm1217
  %v1219 = vsel %vm1218, %v1211, %v1215
  %v1220 = vand.u32 2147483647, %v1210
  %vm1221 = vcmp.eq.f32.partialorder %v1220, 8.507059e+37
  %v1222 = vand.u32 %v1210, 2147483648
  %v1223 = vor.u32 1.1754944e-38, %v1222
  %v1224 = vsel %vm1221, %v1223, %v1219
  %v1225 = vmul.f32 1.0, %v1224
  %v1226 = vtanh.pop %v1206
  %v1227 = vxor.u32 %v1206, 2147483648
  %v1228 = vmul.f32 %v1227, 1.442695
  %v1229 = vpow.pop %v1228
  %v1230 = vadd.f32 %v1229, 1.0
  %v1231 = vrcp.pop %v1230
  %v1232 = vmul.f32 %v1230, %v1231
  %v1233 = vsub.f32 1.0, %v1232
  %v1234 = vmul.f32 %v1231, %v1233
  %v1235 = vadd.f32 %v1231, %v1234
  %vm1236 = vweird.f32 %v1230
  %vm1237 = vweird.f32 %v1231
  %vm1238 = vmor %vm1236, %vm1237
  %v1239 = vsel %vm1238, %v1231, %v1235
  %v1240 = vand.u32 2147483647, %v1230
  %vm1241 = vcmp.eq.f32.partialorder %v1240, 8.507059e+37
  %v1242 = vand.u32 %v1230, 2147483648
  %v1243 = vor.u32 1.1754944e-38, %v1242
  %v1244 = vsel %vm1241, %v1243, %v1239
  %v1245 = vmul.f32 1.0, %v1244
  %v1247 = vrot.slane %v1042, 2
  %v1249 = vmul.f32 %v1225, %v1247
  %v1250 = vmul.f32 %v1225, %v1226
  %1252 = vrot.lane.b32.xlu0 %v1250, 64
  %v1253 = vpop.permute.xlu0 %1252
  %v1255 = vadd.f32 %v1249, %v1253
  %v1256 = vtanh.pop %v1255
  %v1257 = vmul.f32 %v1245, %v1256
  %1259 = vrot.lane.b32.xlu0 %v1257, 64
  %v1260 = vpop.permute.xlu0 %1259
  %1262 = vst.msk [vmem:[#allocation5] sm:$0xc0] %vm389, %v1260
  %v1263 = vld [vmem:[#allocation2 + $0x10] sm:$0xc]
  %v1264 = vld [vmem:[#allocation2 + $0x18] sm:$0xc]
  %v1265 = vsel %vm187, %v1152, 0
  %1267 = vmatpush.msra.mxu0 0.0
  %1268 = vmatpush.msra.mxu0 0.0
  %1269 = vmatpush.msra.mxu0 0.0
  %1270 = vmatpush.msra.mxu0 0.0
  %1271 = vmatpush.msra.mxu0 0.0
  %1272 = vmatpush.msra.mxu0 0.0
  %1273 = vmatpush.msra.mxu0 0.0
  %1274 = vmatpush.msra.mxu0 0.0
  %1275 = vmatpush.msra.mxu0 %v167
  %1276 = vmatpush.msra.mxu0 %v165
  %1277 = vmatpush.msra.mxu0 %v163
  %1278 = vmatpush.msra.mxu0 %v161
  %1279 = vmatpush.msra.mxu0 %v159
  %1280 = vmatpush.msra.mxu0 %v157
  %1281 = vmatpush.msra.mxu0 %v155
  %1282 = vmatpush.msra.mxu0 %v153
  %1283 = vmatmul.f32.gmra.mxu0 %v1265
  %v1284 = vpop.f32.mrf.mxu0
  %v1285 = vadd.f32 0.0, %v1284
  %1286 = vdwg.mxu0
  %1287 = vmatpush.msra.mxu0 0.0
  %1288 = vmatpush.msra.mxu0 0.0
  %1289 = vmatpush.msra.mxu0 0.0
  %1290 = vmatpush.msra.mxu0 0.0
  %1291 = vmatpush.msra.mxu0 0.0
  %1292 = vmatpush.msra.mxu0 0.0
  %1293 = vmatpush.msra.mxu0 0.0
  %1294 = vmatpush.msra.mxu0 0.0
  %1295 = vmatpush.msra.mxu0 %v168
  %1296 = vmatpush.msra.mxu0 %v166
  %1297 = vmatpush.msra.mxu0 %v164
  %1298 = vmatpush.msra.mxu0 %v162
  %1299 = vmatpush.msra.mxu0 %v160
  %1300 = vmatpush.msra.mxu0 %v158
  %1301 = vmatpush.msra.mxu0 %v156
  %1302 = vmatpush.msra.mxu0 %v154
  %1303 = vmatmul.f32.gmra.mxu0 %v1265
  %v1304 = vpop.f32.mrf.mxu0
  %v1305 = vadd.f32 0.0, %v1304
  %1306 = vdwg.mxu0
  %v1309 = vrot.slane %v1285, 6
  %v1310 = vrot.slane %v1305, 6
  %v1313 = vadd.f32 %v1263, %v1309
  %v1314 = vadd.f32 %v1264, %v1310
  %v1315 = vxor.u32 %v1313, 2147483648
  %v1316 = vmul.f32 %v1315, 1.442695
  %v1317 = vpow.pop %v1316
  %v1318 = vadd.f32 %v1317, 1.0
  %v1319 = vrcp.pop %v1318
  %v1320 = vmul.f32 %v1318, %v1319
  %v1321 = vsub.f32 1.0, %v1320
  %v1322 = vmul.f32 %v1319, %v1321
  %v1323 = vadd.f32 %v1319, %v1322
  %vm1324 = vweird.f32 %v1318
  %vm1325 = vweird.f32 %v1319
  %vm1326 = vmor %vm1324, %vm1325
  %v1327 = vsel %vm1326, %v1319, %v1323
  %v1328 = vand.u32 2147483647, %v1318
  %vm1329 = vcmp.eq.f32.partialorder %v1328, 8.507059e+37
  %v1330 = vand.u32 %v1318, 2147483648
  %v1331 = vor.u32 1.1754944e-38, %v1330
  %v1332 = vsel %vm1329, %v1331, %v1327
  %v1333 = vmul.f32 1.0, %v1332
  %v1334 = vtanh.pop %v1314
  %v1335 = vxor.u32 %v1314, 2147483648
  %v1336 = vmul.f32 %v1335, 1.442695
  %v1337 = vpow.pop %v1336
  %v1338 = vadd.f32 %v1337, 1.0
  %v1339 = vrcp.pop %v1338
  %v1340 = vmul.f32 %v1338, %v1339
  %v1341 = vsub.f32 1.0, %v1340
  %v1342 = vmul.f32 %v1339, %v1341
  %v1343 = vadd.f32 %v1339, %v1342
  %vm1344 = vweird.f32 %v1338
  %vm1345 = vweird.f32 %v1339
  %vm1346 = vmor %vm1344, %vm1345
  %v1347 = vsel %vm1346, %v1339, %v1343
  %v1348 = vand.u32 2147483647, %v1338
  %vm1349 = vcmp.eq.f32.partialorder %v1348, 8.507059e+37
  %v1350 = vand.u32 %v1338, 2147483648
  %v1351 = vor.u32 1.1754944e-38, %v1350
  %v1352 = vsel %vm1349, %v1351, %v1347
  %v1353 = vmul.f32 1.0, %v1352
  %v1355 = vrot.slane %v1147, 6
  %v1357 = vmul.f32 %v1333, %v1355
  %v1358 = vmul.f32 %v1333, %v1334
  %1360 = vrot.lane.b32.xlu0 %v1358, 64
  %v1361 = vpop.permute.xlu0 %1360
  %v1363 = vadd.f32 %v1357, %v1361
  %v1364 = vtanh.pop %v1363
  %v1365 = vmul.f32 %v1353, %v1364
  %1367 = vrot.lane.b32.xlu0 %v1365, 64
  %v1368 = vpop.permute.xlu0 %1367
  %1370 = vst.msk [vmem:[#allocation4 + $0x8] sm:$0xc] %vm498, %v1368
  %v1371 = vld [vmem:[#allocation3] sm:$0x30]
  %v1372 = vld [vmem:[#allocation3 + $0x8] sm:$0x30]
  %v1373 = vrot.slane %v1257, 6
  %1374 = vrot.lane.b32.xlu0 %v1373, 64
  %v1375 = vpop.permute.xlu0 %1374
  %v1376 = vsel %vm187, %v1375, 0
  %1378 = vmatpush.msra.mxu0 0.0
  %1379 = vmatpush.msra.mxu0 0.0
  %1380 = vmatpush.msra.mxu0 0.0
  %1381 = vmatpush.msra.mxu0 0.0
  %1382 = vmatpush.msra.mxu0 0.0
  %1383 = vmatpush.msra.mxu0 0.0
  %1384 = vmatpush.msra.mxu0 0.0
  %1385 = vmatpush.msra.mxu0 0.0
  %1386 = vmatpush.msra.mxu0 %v183
  %1387 = vmatpush.msra.mxu0 %v181
  %1388 = vmatpush.msra.mxu0 %v179
  %1389 = vmatpush.msra.mxu0 %v177
  %1390 = vmatpush.msra.mxu0 %v175
  %1391 = vmatpush.msra.mxu0 %v173
  %1392 = vmatpush.msra.mxu0 %v171
  %1393 = vmatpush.msra.mxu0 %v169
  %1394 = vmatmul.f32.gmra.mxu0 %v1376
  %v1395 = vpop.f32.mrf.mxu0
  %v1396 = vadd.f32 0.0, %v1395
  %1397 = vdwg.mxu0
  %1398 = vmatpush.msra.mxu0 0.0
  %1399 = vmatpush.msra.mxu0 0.0
  %1400 = vmatpush.msra.mxu0 0.0
  %1401 = vmatpush.msra.mxu0 0.0
  %1402 = vmatpush.msra.mxu0 0.0
  %1403 = vmatpush.msra.mxu0 0.0
  %1404 = vmatpush.msra.mxu0 0.0
  %1405 = vmatpush.msra.mxu0 0.0
  %1406 = vmatpush.msra.mxu0 %v184
  %1407 = vmatpush.msra.mxu0 %v182
  %1408 = vmatpush.msra.mxu0 %v180
  %1409 = vmatpush.msra.mxu0 %v178
  %1410 = vmatpush.msra.mxu0 %v176
  %1411 = vmatpush.msra.mxu0 %v174
  %1412 = vmatpush.msra.mxu0 %v172
  %1413 = vmatpush.msra.mxu0 %v170
  %1414 = vmatmul.f32.gmra.mxu0 %v1376
  %v1415 = vpop.f32.mrf.mxu0
  %v1416 = vadd.f32 0.0, %v1415
  %1417 = vdwg.mxu0
  %v1420 = vrot.slane %v1396, 4
  %v1421 = vrot.slane %v1416, 4
  %v1424 = vadd.f32 %v1371, %v1420
  %v1425 = vadd.f32 %v1372, %v1421
  %v1426 = vxor.u32 %v1424, 2147483648
  %v1427 = vmul.f32 %v1426, 1.442695
  %v1428 = vpow.pop %v1427
  %v1429 = vadd.f32 %v1428, 1.0
  %v1430 = vrcp.pop %v1429
  %v1431 = vmul.f32 %v1429, %v1430
  %v1432 = vsub.f32 1.0, %v1431
  %v1433 = vmul.f32 %v1430, %v1432
  %v1434 = vadd.f32 %v1430, %v1433
  %vm1435 = vweird.f32 %v1429
  %vm1436 = vweird.f32 %v1430
  %vm1437 = vmor %vm1435, %vm1436
  %v1438 = vsel %vm1437, %v1430, %v1434
  %v1439 = vand.u32 2147483647, %v1429
  %vm1440 = vcmp.eq.f32.partialorder %v1439, 8.507059e+37
  %v1441 = vand.u32 %v1429, 2147483648
  %v1442 = vor.u32 1.1754944e-38, %v1441
  %v1443 = vsel %vm1440, %v1442, %v1438
  %v1444 = vmul.f32 1.0, %v1443
  %v1445 = vtanh.pop %v1425
  %v1446 = vxor.u32 %v1425, 2147483648
  %v1447 = vmul.f32 %v1446, 1.442695
  %v1448 = vpow.pop %v1447
  %v1449 = vadd.f32 %v1448, 1.0
  %v1450 = vrcp.pop %v1449
  %v1451 = vmul.f32 %v1449, %v1450
  %v1452 = vsub.f32 1.0, %v1451
  %v1453 = vmul.f32 %v1450, %v1452
  %v1454 = vadd.f32 %v1450, %v1453
  %vm1455 = vweird.f32 %v1449
  %vm1456 = vweird.f32 %v1450
  %vm1457 = vmor %vm1455, %vm1456
  %v1458 = vsel %vm1457, %v1450, %v1454
  %v1459 = vand.u32 2147483647, %v1449
  %vm1460 = vcmp.eq.f32.partialorder %v1459, 8.507059e+37
  %v1461 = vand.u32 %v1449, 2147483648
  %v1462 = vor.u32 1.1754944e-38, %v1461
  %v1463 = vsel %vm1460, %v1462, %v1458
  %v1464 = vmul.f32 1.0, %v1463
  %v1466 = vrot.slane %v1255, 2
  %v1468 = vmul.f32 %v1444, %v1466
  %v1469 = vmul.f32 %v1444, %v1445
  %1471 = vrot.lane.b32.xlu0 %v1469, 64
  %v1472 = vpop.permute.xlu0 %1471
  %v1474 = vadd.f32 %v1468, %v1472
  %v1475 = vtanh.pop %v1474
  %v1476 = vmul.f32 %v1464, %v1475
  %1478 = vrot.lane.b32.xlu0 %v1476, 64
  %v1479 = vpop.permute.xlu0 %1478
  %1481 = vst.msk [vmem:[#allocation5] sm:$0x30] %vm610, %v1479
  %v1482 = vld [vmem:[#allocation2 + $0x10] sm:$0x30]
  %v1483 = vld [vmem:[#allocation2 + $0x18] sm:$0x30]
  %v1484 = vrot.slane %v1365, 2
  %1485 = vrot.lane.b32.xlu0 %v1484, 64
  %v1486 = vpop.permute.xlu0 %1485
  %v1487 = vsel %vm187, %v1486, 0
  %1489 = vmatpush.msra.mxu0 0.0
  %1490 = vmatpush.msra.mxu0 0.0
  %1491 = vmatpush.msra.mxu0 0.0
  %1492 = vmatpush.msra.mxu0 0.0
  %1493 = vmatpush.msra.mxu0 0.0
  %1494 = vmatpush.msra.mxu0 0.0
  %1495 = vmatpush.msra.mxu0 0.0
  %1496 = vmatpush.msra.mxu0 0.0
  %1497 = vmatpush.msra.mxu0 %v167
  %1498 = vmatpush.msra.mxu0 %v165
  %1499 = vmatpush.msra.mxu0 %v163
  %1500 = vmatpush.msra.mxu0 %v161
  %1501 = vmatpush.msra.mxu0 %v159
  %1502 = vmatpush.msra.mxu0 %v157
  %1503 = vmatpush.msra.mxu0 %v155
  %1504 = vmatpush.msra.mxu0 %v153
  %1505 = vmatmul.f32.gmra.mxu0 %v1487
  %v1506 = vpop.f32.mrf.mxu0
  %v1507 = vadd.f32 0.0, %v1506
  %1508 = vdwg.mxu0
  %1509 = vmatpush.msra.mxu0 0.0
  %1510 = vmatpush.msra.mxu0 0.0
  %1511 = vmatpush.msra.mxu0 0.0
  %1512 = vmatpush.msra.mxu0 0.0
  %1513 = vmatpush.msra.mxu0 0.0
  %1514 = vmatpush.msra.mxu0 0.0
  %1515 = vmatpush.msra.mxu0 0.0
  %1516 = vmatpush.msra.mxu0 0.0
  %1517 = vmatpush.msra.mxu0 %v168
  %1518 = vmatpush.msra.mxu0 %v166
  %1519 = vmatpush.msra.mxu0 %v164
  %1520 = vmatpush.msra.mxu0 %v162
  %1521 = vmatpush.msra.mxu0 %v160
  %1522 = vmatpush.msra.mxu0 %v158
  %1523 = vmatpush.msra.mxu0 %v156
  %1524 = vmatpush.msra.mxu0 %v154
  %1525 = vmatmul.f32.gmra.mxu0 %v1487
  %v1526 = vpop.f32.mrf.mxu0
  %v1527 = vadd.f32 0.0, %v1526
  %1528 = vdwg.mxu0
  %v1531 = vrot.slane %v1507, 4
  %v1532 = vrot.slane %v1527, 4
  %v1535 = vadd.f32 %v1482, %v1531
  %v1536 = vadd.f32 %v1483, %v1532
  %v1537 = vxor.u32 %v1535, 2147483648
  %v1538 = vmul.f32 %v1537, 1.442695
  %v1539 = vpow.pop %v1538
  %v1540 = vadd.f32 %v1539, 1.0
  %v1541 = vrcp.pop %v1540
  %v1542 = vmul.f32 %v1540, %v1541
  %v1543 = vsub.f32 1.0, %v1542
  %v1544 = vmul.f32 %v1541, %v1543
  %v1545 = vadd.f32 %v1541, %v1544
  %vm1546 = vweird.f32 %v1540
  %vm1547 = vweird.f32 %v1541
  %vm1548 = vmor %vm1546, %vm1547
  %v1549 = vsel %vm1548, %v1541, %v1545
  %v1550 = vand.u32 2147483647, %v1540
  %vm1551 = vcmp.eq.f32.partialorder %v1550, 8.507059e+37
  %v1552 = vand.u32 %v1540, 2147483648
  %v1553 = vor.u32 1.1754944e-38, %v1552
  %v1554 = vsel %vm1551, %v1553, %v1549
  %v1555 = vmul.f32 1.0, %v1554
  %v1556 = vtanh.pop %v1536
  %v1557 = vxor.u32 %v1536, 2147483648
  %v1558 = vmul.f32 %v1557, 1.442695
  %v1559 = vpow.pop %v1558
  %v1560 = vadd.f32 %v1559, 1.0
  %v1561 = vrcp.pop %v1560
  %v1562 = vmul.f32 %v1560, %v1561
  %v1563 = vsub.f32 1.0, %v1562
  %v1564 = vmul.f32 %v1561, %v1563
  %v1565 = vadd.f32 %v1561, %v1564
  %vm1566 = vweird.f32 %v1560
  %vm1567 = vweird.f32 %v1561
  %vm1568 = vmor %vm1566, %vm1567
  %v1569 = vsel %vm1568, %v1561, %v1565
  %v1570 = vand.u32 2147483647, %v1560
  %vm1571 = vcmp.eq.f32.partialorder %v1570, 8.507059e+37
  %v1572 = vand.u32 %v1560, 2147483648
  %v1573 = vor.u32 1.1754944e-38, %v1572
  %v1574 = vsel %vm1571, %v1573, %v1569
  %v1575 = vmul.f32 1.0, %v1574
  %v1577 = vrot.slane %v1363, 6
  %v1579 = vmul.f32 %v1555, %v1577
  %v1580 = vmul.f32 %v1555, %v1556
  %1582 = vrot.lane.b32.xlu0 %v1580, 64
  %v1583 = vpop.permute.xlu0 %1582
  %v1585 = vadd.f32 %v1579, %v1583
  %v1586 = vtanh.pop %v1585
  %v1587 = vmul.f32 %v1575, %v1586
  %1589 = vrot.lane.b32.xlu0 %v1587, 64
  %v1590 = vpop.permute.xlu0 %1589
  %1592 = vst.msk [vmem:[#allocation4 + $0x8] sm:$0x30] %vm610, %v1590
  %v1593 = vld [vmem:[#allocation3] sm:$0xc]
  %v1594 = vld [vmem:[#allocation3 + $0x8] sm:$0xc]
  %v1595 = vrot.slane %v1476, 4
  %1596 = vrot.lane.b32.xlu0 %v1595, 64
  %v1597 = vpop.permute.xlu0 %1596
  %v1598 = vsel %vm187, %v1597, 0
  %1600 = vmatpush.msra.mxu0 0.0
  %1601 = vmatpush.msra.mxu0 0.0
  %1602 = vmatpush.msra.mxu0 0.0
  %1603 = vmatpush.msra.mxu0 0.0
  %1604 = vmatpush.msra.mxu0 0.0
  %1605 = vmatpush.msra.mxu0 0.0
  %1606 = vmatpush.msra.mxu0 0.0
  %1607 = vmatpush.msra.mxu0 0.0
  %1608 = vmatpush.msra.mxu0 %v183
  %1609 = vmatpush.msra.mxu0 %v181
  %1610 = vmatpush.msra.mxu0 %v179
  %1611 = vmatpush.msra.mxu0 %v177
  %1612 = vmatpush.msra.mxu0 %v175
  %1613 = vmatpush.msra.mxu0 %v173
  %1614 = vmatpush.msra.mxu0 %v171
  %1615 = vmatpush.msra.mxu0 %v169
  %1616 = vmatmul.f32.gmra.mxu0 %v1598
  %v1617 = vpop.f32.mrf.mxu0
  %v1618 = vadd.f32 0.0, %v1617
  %1619 = vdwg.mxu0
  %1620 = vmatpush.msra.mxu0 0.0
  %1621 = vmatpush.msra.mxu0 0.0
  %1622 = vmatpush.msra.mxu0 0.0
  %1623 = vmatpush.msra.mxu0 0.0
  %1624 = vmatpush.msra.mxu0 0.0
  %1625 = vmatpush.msra.mxu0 0.0
  %1626 = vmatpush.msra.mxu0 0.0
  %1627 = vmatpush.msra.mxu0 0.0
  %1628 = vmatpush.msra.mxu0 %v184
  %1629 = vmatpush.msra.mxu0 %v182
  %1630 = vmatpush.msra.mxu0 %v180
  %1631 = vmatpush.msra.mxu0 %v178
  %1632 = vmatpush.msra.mxu0 %v176
  %1633 = vmatpush.msra.mxu0 %v174
  %1634 = vmatpush.msra.mxu0 %v172
  %1635 = vmatpush.msra.mxu0 %v170
  %1636 = vmatmul.f32.gmra.mxu0 %v1598
  %v1637 = vpop.f32.mrf.mxu0
  %v1638 = vadd.f32 0.0, %v1637
  %1639 = vdwg.mxu0
  %v1642 = vrot.slane %v1618, 6
  %v1643 = vrot.slane %v1638, 6
  %v1646 = vadd.f32 %v1593, %v1642
  %v1647 = vadd.f32 %v1594, %v1643
  %v1648 = vxor.u32 %v1646, 2147483648
  %v1649 = vmul.f32 %v1648, 1.442695
  %v1650 = vpow.pop %v1649
  %v1651 = vadd.f32 %v1650, 1.0
  %v1652 = vrcp.pop %v1651
  %v1653 = vmul.f32 %v1651, %v1652
  %v1654 = vsub.f32 1.0, %v1653
  %v1655 = vmul.f32 %v1652, %v1654
  %v1656 = vadd.f32 %v1652, %v1655
  %vm1657 = vweird.f32 %v1651
  %vm1658 = vweird.f32 %v1652
  %vm1659 = vmor %vm1657, %vm1658
  %v1660 = vsel %vm1659, %v1652, %v1656
  %v1661 = vand.u32 2147483647, %v1651
  %vm1662 = vcmp.eq.f32.partialorder %v1661, 8.507059e+37
  %v1663 = vand.u32 %v1651, 2147483648
  %v1664 = vor.u32 1.1754944e-38, %v1663
  %v1665 = vsel %vm1662, %v1664, %v1660
  %v1666 = vmul.f32 1.0, %v1665
  %v1667 = vtanh.pop %v1647
  %v1668 = vxor.u32 %v1647, 2147483648
  %v1669 = vmul.f32 %v1668, 1.442695
  %v1670 = vpow.pop %v1669
  %v1671 = vadd.f32 %v1670, 1.0
  %v1672 = vrcp.pop %v1671
  %v1673 = vmul.f32 %v1671, %v1672
  %v1674 = vsub.f32 1.0, %v1673
  %v1675 = vmul.f32 %v1672, %v1674
  %v1676 = vadd.f32 %v1672, %v1675
  %vm1677 = vweird.f32 %v1671
  %vm1678 = vweird.f32 %v1672
  %vm1679 = vmor %vm1677, %vm1678
  %v1680 = vsel %vm1679, %v1672, %v1676
  %v1681 = vand.u32 2147483647, %v1671
  %vm1682 = vcmp.eq.f32.partialorder %v1681, 8.507059e+37
  %v1683 = vand.u32 %v1671, 2147483648
  %v1684 = vor.u32 1.1754944e-38, %v1683
  %v1685 = vsel %vm1682, %v1684, %v1680
  %v1686 = vmul.f32 1.0, %v1685
  %v1688 = vrot.slane %v1474, 2
  %v1690 = vmul.f32 %v1666, %v1688
  %v1691 = vmul.f32 %v1666, %v1667
  %1693 = vrot.lane.b32.xlu0 %v1691, 64
  %v1694 = vpop.permute.xlu0 %1693
  %v1696 = vadd.f32 %v1690, %v1694
  %v1697 = vtanh.pop %v1696
  %v1698 = vmul.f32 %v1686, %v1697
  %1700 = vrot.lane.b32.xlu0 %v1698, 64
  %v1701 = vpop.permute.xlu0 %1700
  %1703 = vst.msk [vmem:[#allocation5] sm:$0xc] %vm498, %v1701
  %v1704 = vld [vmem:[#allocation2 + $0x10] sm:$0xc0]
  %v1705 = vld [vmem:[#allocation2 + $0x18] sm:$0xc0]
  %v1706 = vrot.slane %v1587, 4
  %1707 = vrot.lane.b32.xlu0 %v1706, 64
  %v1708 = vpop.permute.xlu0 %1707
  %v1709 = vsel %vm187, %v1708, 0
  %1711 = vmatpush.msra.mxu0 0.0
  %1712 = vmatpush.msra.mxu0 0.0
  %1713 = vmatpush.msra.mxu0 0.0
  %1714 = vmatpush.msra.mxu0 0.0
  %1715 = vmatpush.msra.mxu0 0.0
  %1716 = vmatpush.msra.mxu0 0.0
  %1717 = vmatpush.msra.mxu0 0.0
  %1718 = vmatpush.msra.mxu0 0.0
  %1719 = vmatpush.msra.mxu0 %v167
  %1720 = vmatpush.msra.mxu0 %v165
  %1721 = vmatpush.msra.mxu0 %v163
  %1722 = vmatpush.msra.mxu0 %v161
  %1723 = vmatpush.msra.mxu0 %v159
  %1724 = vmatpush.msra.mxu0 %v157
  %1725 = vmatpush.msra.mxu0 %v155
  %1726 = vmatpush.msra.mxu0 %v153
  %1727 = vmatmul.f32.gmra.mxu0 %v1709
  %v1728 = vpop.f32.mrf.mxu0
  %v1729 = vadd.f32 0.0, %v1728
  %1730 = vdwg.mxu0
  %1731 = vmatpush.msra.mxu0 0.0
  %1732 = vmatpush.msra.mxu0 0.0
  %1733 = vmatpush.msra.mxu0 0.0
  %1734 = vmatpush.msra.mxu0 0.0
  %1735 = vmatpush.msra.mxu0 0.0
  %1736 = vmatpush.msra.mxu0 0.0
  %1737 = vmatpush.msra.mxu0 0.0
  %1738 = vmatpush.msra.mxu0 0.0
  %1739 = vmatpush.msra.mxu0 %v168
  %1740 = vmatpush.msra.mxu0 %v166
  %1741 = vmatpush.msra.mxu0 %v164
  %1742 = vmatpush.msra.mxu0 %v162
  %1743 = vmatpush.msra.mxu0 %v160
  %1744 = vmatpush.msra.mxu0 %v158
  %1745 = vmatpush.msra.mxu0 %v156
  %1746 = vmatpush.msra.mxu0 %v154
  %1747 = vmatmul.f32.gmra.mxu0 %v1709
  %v1748 = vpop.f32.mrf.mxu0
  %v1749 = vadd.f32 0.0, %v1748
  %1750 = vdwg.mxu0
  %v1753 = vrot.slane %v1729, 2
  %v1754 = vrot.slane %v1749, 2
  %v1757 = vadd.f32 %v1704, %v1753
  %v1758 = vadd.f32 %v1705, %v1754
  %v1759 = vxor.u32 %v1757, 2147483648
  %v1760 = vmul.f32 %v1759, 1.442695
  %v1761 = vpow.pop %v1760
  %v1762 = vadd.f32 %v1761, 1.0
  %v1763 = vrcp.pop %v1762
  %v1764 = vmul.f32 %v1762, %v1763
  %v1765 = vsub.f32 1.0, %v1764
  %v1766 = vmul.f32 %v1763, %v1765
  %v1767 = vadd.f32 %v1763, %v1766
  %vm1768 = vweird.f32 %v1762
  %vm1769 = vweird.f32 %v1763
  %vm1770 = vmor %vm1768, %vm1769
  %v1771 = vsel %vm1770, %v1763, %v1767
  %v1772 = vand.u32 2147483647, %v1762
  %vm1773 = vcmp.eq.f32.partialorder %v1772, 8.507059e+37
  %v1774 = vand.u32 %v1762, 2147483648
  %v1775 = vor.u32 1.1754944e-38, %v1774
  %v1776 = vsel %vm1773, %v1775, %v1771
  %v1777 = vmul.f32 1.0, %v1776
  %v1778 = vtanh.pop %v1758
  %v1779 = vxor.u32 %v1758, 2147483648
  %v1780 = vmul.f32 %v1779, 1.442695
  %v1781 = vpow.pop %v1780
  %v1782 = vadd.f32 %v1781, 1.0
  %v1783 = vrcp.pop %v1782
  %v1784 = vmul.f32 %v1782, %v1783
  %v1785 = vsub.f32 1.0, %v1784
  %v1786 = vmul.f32 %v1783, %v1785
  %v1787 = vadd.f32 %v1783, %v1786
  %vm1788 = vweird.f32 %v1782
  %vm1789 = vweird.f32 %v1783
  %vm1790 = vmor %vm1788, %vm1789
  %v1791 = vsel %vm1790, %v1783, %v1787
  %v1792 = vand.u32 2147483647, %v1782
  %vm1793 = vcmp.eq.f32.partialorder %v1792, 8.507059e+37
  %v1794 = vand.u32 %v1782, 2147483648
  %v1795 = vor.u32 1.1754944e-38, %v1794
  %v1796 = vsel %vm1793, %v1795, %v1791
  %v1797 = vmul.f32 1.0, %v1796
  %v1799 = vrot.slane %v1585, 6
  %v1801 = vmul.f32 %v1777, %v1799
  %v1802 = vmul.f32 %v1777, %v1778
  %1804 = vrot.lane.b32.xlu0 %v1802, 64
  %v1805 = vpop.permute.xlu0 %1804
  %v1807 = vadd.f32 %v1801, %v1805
  %v1808 = vtanh.pop %v1807
  %v1809 = vmul.f32 %v1797, %v1808
  %1811 = vrot.lane.b32.xlu0 %v1809, 64
  %v1812 = vpop.permute.xlu0 %1811
  %1814 = vst.msk [vmem:[#allocation4 + $0x8] sm:$0xc0] %vm389, %v1812
  %v1815 = vld [vmem:[#allocation3] sm:$0x3]
  %v1816 = vld [vmem:[#allocation3 + $0x8] sm:$0x3]
  %v1817 = vrot.slane %v1698, 2
  %1818 = vrot.lane.b32.xlu0 %v1817, 64
  %v1819 = vpop.permute.xlu0 %1818
  %v1820 = vsel %vm187, %v1819, 0
  %1822 = vmatpush.msra.mxu0 0.0
  %1823 = vmatpush.msra.mxu0 0.0
  %1824 = vmatpush.msra.mxu0 0.0
  %1825 = vmatpush.msra.mxu0 0.0
  %1826 = vmatpush.msra.mxu0 0.0
  %1827 = vmatpush.msra.mxu0 0.0
  %1828 = vmatpush.msra.mxu0 0.0
  %1829 = vmatpush.msra.mxu0 0.0
  %1830 = vmatpush.msra.mxu0 %v183
  %1831 = vmatpush.msra.mxu0 %v181
  %1832 = vmatpush.msra.mxu0 %v179
  %1833 = vmatpush.msra.mxu0 %v177
  %1834 = vmatpush.msra.mxu0 %v175
  %1835 = vmatpush.msra.mxu0 %v173
  %1836 = vmatpush.msra.mxu0 %v171
  %1837 = vmatpush.msra.mxu0 %v169
  %1838 = vmatmul.f32.gmra.mxu0 %v1820
  %v1839 = vpop.f32.mrf.mxu0
  %v1840 = vadd.f32 0.0, %v1839
  %1841 = vdwg.mxu0
  %1842 = vmatpush.msra.mxu0 0.0
  %1843 = vmatpush.msra.mxu0 0.0
  %1844 = vmatpush.msra.mxu0 0.0
  %1845 = vmatpush.msra.mxu0 0.0
  %1846 = vmatpush.msra.mxu0 0.0
  %1847 = vmatpush.msra.mxu0 0.0
  %1848 = vmatpush.msra.mxu0 0.0
  %1849 = vmatpush.msra.mxu0 0.0
  %1850 = vmatpush.msra.mxu0 %v184
  %1851 = vmatpush.msra.mxu0 %v182
  %1852 = vmatpush.msra.mxu0 %v180
  %1853 = vmatpush.msra.mxu0 %v178
  %1854 = vmatpush.msra.mxu0 %v176
  %1855 = vmatpush.msra.mxu0 %v174
  %1856 = vmatpush.msra.mxu0 %v172
  %1857 = vmatpush.msra.mxu0 %v170
  %1858 = vmatmul.f32.gmra.mxu0 %v1820
  %v1859 = vpop.f32.mrf.mxu0
  %v1860 = vadd.f32 0.0, %v1859
  %1861 = vdwg.mxu0
  %v1862 = vadd.f32 %v1815, %v1840
  %v1863 = vadd.f32 %v1816, %v1860
  %v1864 = vxor.u32 %v1862, 2147483648
  %v1865 = vmul.f32 %v1864, 1.442695
  %v1866 = vpow.pop %v1865
  %v1867 = vadd.f32 %v1866, 1.0
  %v1868 = vrcp.pop %v1867
  %v1869 = vmul.f32 %v1867, %v1868
  %v1870 = vsub.f32 1.0, %v1869
  %v1871 = vmul.f32 %v1868, %v1870
  %v1872 = vadd.f32 %v1868, %v1871
  %vm1873 = vweird.f32 %v1867
  %vm1874 = vweird.f32 %v1868
  %vm1875 = vmor %vm1873, %vm1874
  %v1876 = vsel %vm1875, %v1868, %v1872
  %v1877 = vand.u32 2147483647, %v1867
  %vm1878 = vcmp.eq.f32.partialorder %v1877, 8.507059e+37
  %v1879 = vand.u32 %v1867, 2147483648
  %v1880 = vor.u32 1.1754944e-38, %v1879
  %v1881 = vsel %vm1878, %v1880, %v1876
  %v1882 = vmul.f32 1.0, %v1881
  %v1883 = vtanh.pop %v1863
  %v1884 = vxor.u32 %v1863, 2147483648
  %v1885 = vmul.f32 %v1884, 1.442695
  %v1886 = vpow.pop %v1885
  %v1887 = vadd.f32 %v1886, 1.0
  %v1888 = vrcp.pop %v1887
  %v1889 = vmul.f32 %v1887, %v1888
  %v1890 = vsub.f32 1.0, %v1889
  %v1891 = vmul.f32 %v1888, %v1890
  %v1892 = vadd.f32 %v1888, %v1891
  %vm1893 = vweird.f32 %v1887
  %vm1894 = vweird.f32 %v1888
  %vm1895 = vmor %vm1893, %vm1894
  %v1896 = vsel %vm1895, %v1888, %v1892
  %v1897 = vand.u32 2147483647, %v1887
  %vm1898 = vcmp.eq.f32.partialorder %v1897, 8.507059e+37
  %v1899 = vand.u32 %v1887, 2147483648
  %v1900 = vor.u32 1.1754944e-38, %v1899
  %v1901 = vsel %vm1898, %v1900, %v1896
  %v1902 = vmul.f32 1.0, %v1901
  %v1904 = vrot.slane %v1696, 2
  %v1906 = vmul.f32 %v1882, %v1904
  %v1907 = vmul.f32 %v1882, %v1883
  %1909 = vrot.lane.b32.xlu0 %v1907, 64
  %v1910 = vpop.permute.xlu0 %1909
  %v1912 = vadd.f32 %v1906, %v1910
  %v1913 = vtanh.pop %v1912
  %v1914 = vmul.f32 %v1902, %v1913
  %1916 = vrot.lane.b32.xlu0 %v1914, 64
  %v1917 = vpop.permute.xlu0 %1916
  %1919 = vst.msk [vmem:[#allocation5] sm:$0x3] %vm285, %v1917
  %v1920 = vld [vmem:[#allocation4] sm:$0xff]
  %v1921 = vld [vmem:[#allocation4 + $0x8] sm:$0xff]
  %v1922 = vld [vmem:[%s5] sm:$0xff]
  %v1923 = vld [vmem:[%s5 + $0x8] sm:$0xff]
  %v1924 = vld [vmem:[%s5 + $0x10] sm:$0xff]
  %v1925 = vld [vmem:[%s5 + $0x18] sm:$0xff]
  %v1926 = vld [vmem:[%s5 + $0x20] sm:$0xff]
  %v1927 = vld [vmem:[%s5 + $0x28] sm:$0xff]
  %v1928 = vld [vmem:[%s5 + $0x30] sm:$0xff]
  %v1929 = vld [vmem:[%s5 + $0x38] sm:$0xff]
  %v1930 = vld [vmem:[#allocation5] sm:$0xff]
  %v1931 = vld [vmem:[#allocation5 + $0x8] sm:$0xff]
  %v1932 = vld [vmem:[%s6] sm:$0xff]
  %v1933 = vld [vmem:[%s6 + $0x8] sm:$0xff]
  %v1934 = vld [vmem:[%s6 + $0x10] sm:$0xff]
  %v1935 = vld [vmem:[%s6 + $0x18] sm:$0xff]
  %v1936 = vld [vmem:[%s6 + $0x20] sm:$0xff]
  %v1937 = vld [vmem:[%s6 + $0x28] sm:$0xff]
  %v1938 = vld [vmem:[%s6 + $0x30] sm:$0xff]
  %v1939 = vld [vmem:[%s6 + $0x38] sm:$0xff]
  %v1941 = vsel %vm187, %v1930, 0
  %v1944 = vsel %vm187, %v1931, 0
  %1946 = vmatpush.msra.mxu0 0.0
  %1947 = vmatpush.msra.mxu0 0.0
  %1948 = vmatpush.msra.mxu0 0.0
  %1949 = vmatpush.msra.mxu0 0.0
  %1950 = vmatpush.msra.mxu0 0.0
  %1951 = vmatpush.msra.mxu0 0.0
  %1952 = vmatpush.msra.mxu0 0.0
  %1953 = vmatpush.msra.mxu0 0.0
  %1954 = vmatpush.msra.mxu0 %v1939
  %1955 = vmatpush.msra.mxu0 %v1938
  %1956 = vmatpush.msra.mxu0 %v1937
  %1957 = vmatpush.msra.mxu0 %v1936
  %1958 = vmatpush.msra.mxu0 %v1935
  %1959 = vmatpush.msra.mxu0 %v1934
  %1960 = vmatpush.msra.mxu0 %v1933
  %1961 = vmatpush.msra.mxu0 %v1932
  %1962 = vmatmul.f32.gmra.mxu0 %v1941
  %v1963 = vpop.f32.mrf.mxu0
  %v1964 = vadd.f32 0.0, %v1963
  %1965 = vmatmul.f32.gmra.mxu0 %v1944
  %v1966 = vpop.f32.mrf.mxu0
  %v1967 = vadd.f32 0.0, %v1966
  %1968 = vdwg.mxu0
  %v1970 = vsel %vm187, %v1920, 0
  %v1973 = vsel %vm187, %v1921, 0
  %1975 = vmatpush.msra.mxu0 0.0
  %1976 = vmatpush.msra.mxu0 0.0
  %1977 = vmatpush.msra.mxu0 0.0
  %1978 = vmatpush.msra.mxu0 0.0
  %1979 = vmatpush.msra.mxu0 0.0
  %1980 = vmatpush.msra.mxu0 0.0
  %1981 = vmatpush.msra.mxu0 0.0
  %1982 = vmatpush.msra.mxu0 0.0
  %1983 = vmatpush.msra.mxu0 %v1929
  %1984 = vmatpush.msra.mxu0 %v1928
  %1985 = vmatpush.msra.mxu0 %v1927
  %1986 = vmatpush.msra.mxu0 %v1926
  %1987 = vmatpush.msra.mxu0 %v1925
  %1988 = vmatpush.msra.mxu0 %v1924
  %1989 = vmatpush.msra.mxu0 %v1923
  %1990 = vmatpush.msra.mxu0 %v1922
  %1991 = vmatmul.f32.gmra.mxu0 %v1970
  %v1992 = vpop.f32.mrf.mxu0
  %v1993 = vadd.f32 %v1964, %v1992
  %1994 = vmatmul.f32.gmra.mxu0 %v1973
  %v1995 = vpop.f32.mrf.mxu0
  %v1996 = vadd.f32 %v1967, %v1995
  %1997 = vdwg.mxu0
  %1998 = vst.msk [vmem:[%s7] sm:$0xff] %vm187, %v1993
  %1999 = vst.msk [vmem:[%s7 + $0x8] sm:$0xff] %vm187, %v1996
  // Predicated region
  $region30: #{rnnstack_forward.1} parent=0 // pred_check
    _
  $region31: #{rnnstack_forward.1} parent=0 // pred_check_branch
    %2001 = sbr.rel (0) target = $region33
  $region32: #{rnnstack_forward.1} parent=0 // pred_region
    _
  $region33: #{rnnstack_forward.1} parent=0 // pred_fallthru
    _
  // Predicated region
  $region34: #{rnnstack_forward.1} parent=0 // pred_check
    _
  $region35: #{rnnstack_forward.1} parent=0 // pred_check_branch
    %2003 = sbr.rel (0) target = $region37
  $region36: #{rnnstack_forward.1} parent=0 // pred_region
    _
  $region37: #{rnnstack_forward.1} parent=0 // pred_fallthru
    _

</llo_original>
